<compile_context>
chip_gen: v5e
topology: v5e:2x2
jax: 0.10.0
libtpu: 0.0.40
codegen_flags: <defaults>
</compile_context>

<pallas_src>
import functools

import jax
import jax.numpy as jnp
from jax.experimental import pallas as pl
from jax.experimental.pallas import tpu as pltpu


# ----------------------------------------------------------------------------
# Glue: PyTorch-equivalent bilinear x2 upsample (align_corners=False), NHWC.
# ----------------------------------------------------------------------------
def bilinear_upsample_x2(x):
    n, h, w, c = x.shape

    def src_index(n_out, n_in):
        i = jnp.arange(n_out, dtype=jnp.float32)
        src = jnp.maximum((i + 0.5) * 0.5 - 0.5, 0.0)   # PyTorch clamps src >= 0
        i0 = jnp.floor(src).astype(jnp.int32)
        i1 = jnp.minimum(i0 + 1, n_in - 1)
        frac = src - i0.astype(jnp.float32)
        return i0, i1, frac

    h0, h1, fh = src_index(2 * h, h)
    w0, w1, fw = src_index(2 * w, w)

    xh = (jnp.take(x, h0, axis=1) * (1.0 - fh)[None, :, None, None]
          + jnp.take(x, h1, axis=1) * fh[None, :, None, None])
    out = (jnp.take(xh, w0, axis=2) * (1.0 - fw)[None, None, :, None]
           + jnp.take(xh, w1, axis=2) * fw[None, None, :, None])
    return out


# ----------------------------------------------------------------------------
# Weight pre-lowering (wrapper-side, done once per trace):
#  - 3x3 conv  -> a single (3*W*Ci, W*Co) matrix: width taps + width padding
#    folded into a block-banded structure, vertical taps stacked along K.
#  - 1x1 conv  -> block-diagonal (W*Ci, W*Co) matrix on the same flat axis.
# ----------------------------------------------------------------------------
def banded_conv_weight(w, W):
    """w: (3, 3, Ci, Co)  ->  (3*W*Ci, W*Co); K rows ordered [dy=0 | dy=1 | dy=2]."""
    _, _, Ci, Co = w.shape
    wi = jnp.arange(W)[:, None]
    wo = jnp.arange(W)[None, :]
    dx = wi - wo + 1                                    # (W, W)
    valid = (dx >= 0) & (dx <= 2)
    g = w[:, jnp.clip(dx, 0, 2), :, :]                  # (3, Win, Wout, Ci, Co)
    g = jnp.where(valid[None, :, :, None, None], g, 0.0)
    g = jnp.transpose(g, (0, 1, 3, 2, 4))               # (3, Win, Ci, Wout, Co)
    return g.reshape(3 * W * Ci, W * Co)


def block_diag_weight(w3, W):
    """w3: (Ci, Co) 1x1 conv -> (W*Ci, W*Co) block-diagonal matrix."""
    return jnp.kron(jnp.eye(W, dtype=w3.dtype), w3)


# ----------------------------------------------------------------------------
# Fused Pallas kernel: conv1+BN+ReLU -> conv2+BN, conv3+BN on residual,
# add, final ReLU.  One grid step per batch element, everything lane-dense.
# ----------------------------------------------------------------------------
def make_res_decoder_kernel(downsample):
    def conv3x3(v_bf16, w_ref):
        # rows (h-1, h, h+1) with zero fill (height padding), stacked on lanes,
        # then a single MXU matmul against the pre-banded weight.
        z = jnp.zeros((1, v_bf16.shape[-1]), v_bf16.dtype)
        dn = jnp.concatenate([z, v_bf16[:-1, :]], axis=0)      # x[h-1]
        up = jnp.concatenate([v_bf16[1:, :], z], axis=0)       # x[h+1]
        x3 = jnp.concatenate([dn, v_bf16, up], axis=-1)        # (H, 3*W*C)
        return jnp.dot(x3, w_ref[...], preferred_element_type=jnp.float32)

    def kernel(x_ref, w1_ref, w2_ref, w3_ref, sb_ref, o_ref):
        xb = x_ref[0]                                   # (H, W*Cin) bf16
        sb = sb_ref[...]                                # (6, W*Cout) f32
        s1, b1 = sb[0:1, :], sb[1:2, :]
        s2, b2 = sb[2:3, :], sb[3:4, :]
        s3, b3 = sb[4:5, :], sb[5:6, :]

        # ---- conv1 (single banded matmul, K = 3*W*Cin) + BN + ReLU ----------
        h1 = conv3x3(xb, w1_ref) * s1 + b1
        h1 = jnp.maximum(h1, 0.0)                       # (H, W*Cout) f32

        # ---- conv2 (single banded matmul, K = 3*W*Cout) + BN ----------------
        out2 = conv3x3(h1.astype(jnp.bfloat16), w2_ref) * s2 + b2

        # ---- residual: 1x1 conv (block-diagonal matmul) + BN if needed ------
        if downsample:
            res = jnp.dot(xb, w3_ref[...], preferred_element_type=jnp.float32)
            res = res * s3 + b3
        else:
            res = xb.astype(jnp.float32)                # requires Cin == Cout

        # ---- add + final ReLU, lane-dense full-width store ------------------
        o_ref[0] = jnp.maximum(out2 + res, 0.0)

    return kernel


def res_decoder_block_pallas(x_nchw, skip_nchw, params, downsample):
    """x_nchw: (N, Cin_x, h, w); skip_nchw: (N, Cskip, 2h, 2w).  Returns NCHW."""
    x = jnp.transpose(x_nchw, (0, 2, 3, 1)).astype(jnp.float32)       # NHWC
    skip = jnp.transpose(skip_nchw, (0, 2, 3, 1)).astype(jnp.float32)

    x = bilinear_upsample_x2(x)
    xcat = jnp.concatenate([x, skip], axis=-1)                         # attention1 = Identity
    N, H, W, Cin = xcat.shape
    Cout = params["w1"].shape[-1]
    if not downsample:
        assert Cin == Cout, "identity residual requires Cin == Cout"

    # lane-flattened bf16 kernel input (fuses with the upsample/concat fusion)
    x_flat = xcat.reshape(N, H, W * Cin).astype(jnp.bfloat16)

    WCi, WCo = W * Cin, W * Cout
    w1b = banded_conv_weight(params["w1"], W).astype(jnp.bfloat16)     # (3*WCi, WCo)
    w2b = banded_conv_weight(params["w2"], W).astype(jnp.bfloat16)     # (3*WCo, WCo)
    w3b = block_diag_weight(params["w3"].reshape(Cin, Cout), W).astype(jnp.bfloat16)

    def tile_cvec(v):                                                   # (Cout,) -> (W*Cout,)
        return jnp.tile(v.reshape(1, Cout), (1, W)).reshape(WCo)

    sb = jnp.stack([tile_cvec(params["s1"]), tile_cvec(params["b1"]),
                    tile_cvec(params["s2"]), tile_cvec(params["b2"]),
                    tile_cvec(params["s3"]), tile_cvec(params["b3"])],
                   axis=0).astype(jnp.float32)                          # (6, WCo)

    def rep(arr):
        nd = arr.ndim
        return pl.BlockSpec(arr.shape, lambda n, _nd=nd: (0,) * _nd)

    kernel = make_res_decoder_kernel(downsample)

    out_flat = pl.pallas_call(
        kernel,
        out_shape=jax.ShapeDtypeStruct((N, H, WCo), jnp.float32),
        grid_spec=pltpu.PrefetchScalarGridSpec(
            num_scalar_prefetch=0,
            grid=(N,),
            in_specs=[
                pl.BlockSpec((1, H, WCi), lambda n: (n, 0, 0)),
                rep(w1b), rep(w2b), rep(w3b), rep(sb),
            ],
            out_specs=pl.BlockSpec((1, H, WCo), lambda n: (n, 0, 0)),
        ),
        compiler_params=pltpu.CompilerParams(dimension_semantics=("parallel",)),
    )(x_flat, w1b, w2b, w3b, sb)

    out = out_flat.reshape(N, H, W, Cout)
    return jnp.transpose(out, (0, 3, 1, 2))                            # back to NCHW


# ----------------------------------------------------------------------------
# Pure-JAX reference with the SAME bf16 matmul casts (folded-BN params).
# ----------------------------------------------------------------------------
def ref_forward_nhwc(xcat, p, downsample):
    conv = functools.partial(
        jax.lax.conv_general_dilated, window_strides=(1, 1), padding="SAME",
        dimension_numbers=("NHWC", "HWIO", "NHWC"),
        preferred_element_type=jnp.float32)
    xb = xcat.astype(jnp.bfloat16)
    h = jnp.maximum(conv(xb, p["w1"].astype(jnp.bfloat16)) * p["s1"] + p["b1"], 0.0)
    h = conv(h.astype(jnp.bfloat16), p["w2"].astype(jnp.bfloat16)) * p["s2"] + p["b2"]
    res = xcat
    if downsample:
        res = conv(xb, p["w3"].astype(jnp.bfloat16)) * p["s3"] + p["b3"]
    return jnp.maximum(h + res, 0.0)


# ----------------------------------------------------------------------------
# Deterministic parameter construction (synthetic init; no checkpoints).
# ----------------------------------------------------------------------------
def make_params(key, cin_cat, cout):
    ks = jax.random.split(key, 16)
    eps = 1e-5

    def bn_fold(kg, kb, km, kv, c):
        gamma = 1.0 + 0.1 * jax.random.normal(kg, (c,), jnp.float32)
        beta = 0.05 * jax.random.normal(kb, (c,), jnp.float32)
        mean = 0.1 * jax.random.normal(km, (c,), jnp.float32)
        var = 0.5 + jnp.abs(jax.random.normal(kv, (c,), jnp.float32)) * 0.5
        s = gamma / jnp.sqrt(var + eps)
        b = beta - mean * s
        return s, b

    p = {}
    p["w1"] = 0.1 * jax.random.normal(ks[0], (3, 3, cin_cat, cout), jnp.float32)
    p["w2"] = 0.1 * jax.random.normal(ks[1], (3, 3, cout, cout), jnp.float32)
    p["w3"] = 0.1 * jax.random.normal(ks[2], (1, 1, cin_cat, cout), jnp.float32)
    p["s1"], p["b1"] = bn_fold(ks[3], ks[4], ks[5], ks[6], cout)
    p["s2"], p["b2"] = bn_fold(ks[7], ks[8], ks[9], ks[10], cout)
    p["s3"], p["b3"] = bn_fold(ks[11], ks[12], ks[13], ks[14], cout)
    return p


if __name__ == "__main__":
    # in_channels=4, skip_channels=4, out_channels=16  ->  downsample=True (8 != 16)
    in_ch, skip_ch, out_ch = 4, 4, 16
    N, h, w = 2, 8, 8
    downsample = (in_ch + skip_ch) != out_ch

    key = jax.random.PRNGKey(0)
    kx, ksk, kp = jax.random.split(key, 3)
    x = jax.random.normal(kx, (N, in_ch, h, w), jnp.float32)            # NCHW (PyTorch)
    skip = jax.random.normal(ksk, (N, skip_ch, 2 * h, 2 * w), jnp.float32)

    params = make_params(kp, in_ch + skip_ch, out_ch)

    out = res_decoder_block_pallas(x, skip, params, downsample)
    out = jax.block_until_ready(out)

    # correctness check against pure-JAX reference on the same concatenated input
    x_nhwc = bilinear_upsample_x2(jnp.transpose(x, (0, 2, 3, 1)))
    xcat = jnp.concatenate([x_nhwc, jnp.transpose(skip, (0, 2, 3, 1))], axis=-1)
    ref = jnp.transpose(ref_forward_nhwc(xcat, params, downsample), (0, 3, 1, 2))
    assert out.shape == (N, out_ch, 2 * h, 2 * w)
    assert jnp.allclose(out, ref, rtol=2e-3, atol=2e-3), float(jnp.max(jnp.abs(out - ref)))

    print("KERNEL_OK")
</pallas_src>

<mosaic_0001>
module attributes {stable_mosaic.version = 11 : i64} {
  func.func @kernel(%arg0: i32, %arg1: memref<1x16x128xbf16, #tpu.memory_space<vmem>>, %arg2: memref<384x256xbf16, #tpu.memory_space<vmem>>, %arg3: memref<768x256xbf16, #tpu.memory_space<vmem>>, %arg4: memref<128x256xbf16, #tpu.memory_space<vmem>>, %arg5: memref<6x256xf32, #tpu.memory_space<vmem>>, %arg6: memref<1x16x256xf32, #tpu.memory_space<vmem>>) attributes {dimension_semantics = [#tpu.dimension_semantics<parallel>], iteration_bounds = array<i64: 2>, scalar_prefetch = 0 : i64, scratch_operands = 0 : i64, tpu.core_type = #tpu.core_type<tc>, window_params = [{transform_indices = @transform_0, window_bounds = array<i64: 1, 16, 128>}, {pipeline_mode = #tpu.pipeline_mode<synchronous>, transform_indices = @transform_1, window_bounds = array<i64: 384, 256>}, {pipeline_mode = #tpu.pipeline_mode<synchronous>, transform_indices = @transform_2, window_bounds = array<i64: 768, 256>}, {pipeline_mode = #tpu.pipeline_mode<synchronous>, transform_indices = @transform_3, window_bounds = array<i64: 128, 256>}, {pipeline_mode = #tpu.pipeline_mode<synchronous>, transform_indices = @transform_4, window_bounds = array<i64: 6, 256>}, {transform_indices = @transform_5, window_bounds = array<i64: 1, 16, 256>}]} {
    %c0 = arith.constant 0 : index
    %c0_0 = arith.constant 0 : index
    %c0_1 = arith.constant 0 : index
    %0 = vector.load %arg1[%c0, %c0_0, %c0_1] : memref<1x16x128xbf16, #tpu.memory_space<vmem>>, vector<1x16x128xbf16>
    %1 = vector.shape_cast %0 : vector<1x16x128xbf16> to vector<16x128xbf16>
    %c0_2 = arith.constant 0 : index
    %c0_3 = arith.constant 0 : index
    %2 = vector.load %arg5[%c0_2, %c0_3] : memref<6x256xf32, #tpu.memory_space<vmem>>, vector<6x256xf32>
    %3 = vector.extract_strided_slice %2 {offsets = [0, 0], sizes = [1, 256], strides = [1, 1]} : vector<6x256xf32> to vector<1x256xf32>
    %4 = vector.extract_strided_slice %2 {offsets = [1, 0], sizes = [1, 256], strides = [1, 1]} : vector<6x256xf32> to vector<1x256xf32>
    %5 = vector.extract_strided_slice %2 {offsets = [2, 0], sizes = [1, 256], strides = [1, 1]} : vector<6x256xf32> to vector<1x256xf32>
    %6 = vector.extract_strided_slice %2 {offsets = [3, 0], sizes = [1, 256], strides = [1, 1]} : vector<6x256xf32> to vector<1x256xf32>
    %7 = vector.extract_strided_slice %2 {offsets = [4, 0], sizes = [1, 256], strides = [1, 1]} : vector<6x256xf32> to vector<1x256xf32>
    %8 = vector.extract_strided_slice %2 {offsets = [5, 0], sizes = [1, 256], strides = [1, 1]} : vector<6x256xf32> to vector<1x256xf32>
    %cst = arith.constant 0.000000e+00 : bf16
    %9 = vector.broadcast %cst : bf16 to vector<1x128xbf16>
    %10 = vector.extract_strided_slice %1 {offsets = [0, 0], sizes = [15, 128], strides = [1, 1]} : vector<16x128xbf16> to vector<15x128xbf16>
    %11 = tpu.concatenate %9, %10 in 0 : vector<1x128xbf16>, vector<15x128xbf16> -> vector<16x128xbf16>
    %12 = vector.extract_strided_slice %1 {offsets = [1, 0], sizes = [15, 128], strides = [1, 1]} : vector<16x128xbf16> to vector<15x128xbf16>
    %13 = tpu.concatenate %12, %9 in 0 : vector<15x128xbf16>, vector<1x128xbf16> -> vector<16x128xbf16>
    %14 = tpu.concatenate %11, %1, %13 in 1 : vector<16x128xbf16>, vector<16x128xbf16>, vector<16x128xbf16> -> vector<16x384xbf16>
    %c0_4 = arith.constant 0 : index
    %c0_5 = arith.constant 0 : index
    %15 = vector.load %arg2[%c0_4, %c0_5] : memref<384x256xbf16, #tpu.memory_space<vmem>>, vector<384x256xbf16>
    %cst_6 = arith.constant dense<0.000000e+00> : vector<16x256xf32>
    %16 = tpu.matmul %14, %15, %cst_6 {dimension_numbers = #tpu.dot_dimension_numbers<[1], [0], [0], [1], [0, 0, 1, 1], [], []>} : vector<16x384xbf16>, vector<384x256xbf16>, vector<16x256xf32> -> vector<16x256xf32>
    %17 = vector.broadcast %3 : vector<1x256xf32> to vector<16x256xf32>
    %18 = arith.mulf %16, %17 : vector<16x256xf32>
    %19 = vector.broadcast %4 : vector<1x256xf32> to vector<16x256xf32>
    %20 = arith.addf %18, %19 : vector<16x256xf32>
    %cst_7 = arith.constant 0.000000e+00 : f32
    %21 = vector.broadcast %cst_7 : f32 to vector<16x256xf32>
    %22 = arith.maximumf %20, %21 : vector<16x256xf32>
    %23 = arith.truncf %22 : vector<16x256xf32> to vector<16x256xbf16>
    %cst_8 = arith.constant 0.000000e+00 : bf16
    %24 = vector.broadcast %cst_8 : bf16 to vector<1x256xbf16>
    %25 = vector.extract_strided_slice %23 {offsets = [0, 0], sizes = [15, 256], strides = [1, 1]} : vector<16x256xbf16> to vector<15x256xbf16>
    %26 = tpu.concatenate %24, %25 in 0 : vector<1x256xbf16>, vector<15x256xbf16> -> vector<16x256xbf16>
    %27 = vector.extract_strided_slice %23 {offsets = [1, 0], sizes = [15, 256], strides = [1, 1]} : vector<16x256xbf16> to vector<15x256xbf16>
    %28 = tpu.concatenate %27, %24 in 0 : vector<15x256xbf16>, vector<1x256xbf16> -> vector<16x256xbf16>
    %29 = tpu.concatenate %26, %23, %28 in 1 : vector<16x256xbf16>, vector<16x256xbf16>, vector<16x256xbf16> -> vector<16x768xbf16>
    %c0_9 = arith.constant 0 : index
    %c0_10 = arith.constant 0 : index
    %30 = vector.load %arg3[%c0_9, %c0_10] : memref<768x256xbf16, #tpu.memory_space<vmem>>, vector<768x256xbf16>
    %cst_11 = arith.constant dense<0.000000e+00> : vector<16x256xf32>
    %31 = tpu.matmul %29, %30, %cst_11 {dimension_numbers = #tpu.dot_dimension_numbers<[1], [0], [0], [1], [0, 0, 1, 1], [], []>} : vector<16x768xbf16>, vector<768x256xbf16>, vector<16x256xf32> -> vector<16x256xf32>
    %32 = vector.broadcast %5 : vector<1x256xf32> to vector<16x256xf32>
    %33 = arith.mulf %31, %32 : vector<16x256xf32>
    %34 = vector.broadcast %6 : vector<1x256xf32> to vector<16x256xf32>
    %35 = arith.addf %33, %34 : vector<16x256xf32>
    %c0_12 = arith.constant 0 : index
    %c0_13 = arith.constant 0 : index
    %36 = vector.load %arg4[%c0_12, %c0_13] : memref<128x256xbf16, #tpu.memory_space<vmem>>, vector<128x256xbf16>
    %cst_14 = arith.constant dense<0.000000e+00> : vector<16x256xf32>
    %37 = tpu.matmul %1, %36, %cst_14 {dimension_numbers = #tpu.dot_dimension_numbers<[1], [0], [0], [1], [0, 0, 1, 1], [], []>} : vector<16x128xbf16>, vector<128x256xbf16>, vector<16x256xf32> -> vector<16x256xf32>
    %38 = vector.broadcast %7 : vector<1x256xf32> to vector<16x256xf32>
    %39 = arith.mulf %37, %38 : vector<16x256xf32>
    %40 = vector.broadcast %8 : vector<1x256xf32> to vector<16x256xf32>
    %41 = arith.addf %39, %40 : vector<16x256xf32>
    %42 = arith.addf %35, %41 : vector<16x256xf32>
    %cst_15 = arith.constant 0.000000e+00 : f32
    %43 = vector.broadcast %cst_15 : f32 to vector<16x256xf32>
    %44 = arith.maximumf %42, %43 : vector<16x256xf32>
    %c0_16 = arith.constant 0 : index
    %c0_17 = arith.constant 0 : index
    %c0_18 = arith.constant 0 : index
    %45 = vector.load %arg6[%c0_16, %c0_17, %c0_18] : memref<1x16x256xf32, #tpu.memory_space<vmem>>, vector<1x16x256xf32>
    %46 = vector.shape_cast %45 : vector<1x16x256xf32> to vector<16x256xf32>
    %47 = vector.shape_cast %44 : vector<16x256xf32> to vector<1x16x256xf32>
    tpu.vector_store %arg6[%c0_16, %c0_17, %c0_18], %47 {strides = array<i32>} : memref<1x16x256xf32, #tpu.memory_space<vmem>>, vector<1x16x256xf32>,
    return
  }
  func.func @transform_0(%arg0: i32) -> (i32, i32, i32) {
    %c0_i32 = arith.constant 0 : i32
    %c0_i32_0 = arith.constant 0 : i32
    %c0_i32_1 = arith.constant 0 : i32
    return %arg0, %c0_i32, %c0_i32_0 : i32, i32, i32
  }
  func.func @transform_1(%arg0: i32) -> (i32, i32) {
    %c0_i32 = arith.constant 0 : i32
    %c0_i32_0 = arith.constant 0 : i32
    %c0_i32_1 = arith.constant 0 : i32
    return %c0_i32, %c0_i32_0 : i32, i32
  }
  func.func @transform_2(%arg0: i32) -> (i32, i32) {
    %c0_i32 = arith.constant 0 : i32
    %c0_i32_0 = arith.constant 0 : i32
    %c0_i32_1 = arith.constant 0 : i32
    return %c0_i32, %c0_i32_0 : i32, i32
  }
  func.func @transform_3(%arg0: i32) -> (i32, i32) {
    %c0_i32 = arith.constant 0 : i32
    %c0_i32_0 = arith.constant 0 : i32
    %c0_i32_1 = arith.constant 0 : i32
    return %c0_i32, %c0_i32_0 : i32, i32
  }
  func.func @transform_4(%arg0: i32) -> (i32, i32) {
    %c0_i32 = arith.constant 0 : i32
    %c0_i32_0 = arith.constant 0 : i32
    %c0_i32_1 = arith.constant 0 : i32
    return %c0_i32, %c0_i32_0 : i32, i32
  }
  func.func @transform_5(%arg0: i32) -> (i32, i32, i32) {
    %c0_i32 = arith.constant 0 : i32
    %c0_i32_0 = arith.constant 0 : i32
    %c0_i32_1 = arith.constant 0 : i32
    return %arg0, %c0_i32, %c0_i32_0 : i32, i32, i32
  }
}

</mosaic_0001>

<llo_original>
// kernel: tpu_custom_call.1
$region0: #{tpu_custom_call.1}
  #allocation0 [shape = 'u32[]', space=smem, size = 0x4, offset = 0x4, fixed_abs, tag = 'smem constant byte address 0x4 - core index']
  #allocation1 [shape = 'u32[72,128]{1,0:T(1,128)}', space=vmem, size = 0x9000, scoped, tag = 'internal scratch']
  %s0 = inlined_call_operand.hbm [shape: bf16[2,16,128], index: 0, kind: input, shape index: {}]
  %s1 = inlined_call_operand.hbm [shape: bf16[384,256], index: 1, kind: input, shape index: {}]
  %s2 = inlined_call_operand.hbm [shape: bf16[768,256], index: 2, kind: input, shape index: {}]
  %s3 = inlined_call_operand.hbm [shape: bf16[128,256], index: 3, kind: input, shape index: {}]
  %s4 = inlined_call_operand.hbm [shape: f32[6,256], index: 4, kind: input, shape index: {}]
  %s5 = inlined_call_operand.hbm [shape: f32[2,16,256], index: 5, kind: output, shape index: {}]
  %s6 = sld [smem:[#allocation0]]
  $region73: #{tpu_custom_call.1} parent=0
    _
  %s8 = ssub.s32 1, %s6
  %s9 = scalar_select 0, %s8, %s6
  $region1: #{tpu_custom_call.1} parent=0
    #allocation2 [shape = 'u8[8192]{0}', space=vmem, size = 0x2000, scoped, tag = 'input window, operand 0']
    #allocation3 [shape = 's32[2]{0}', space=sflag, size = 0x8, scoped, tag = 'scoped memory for tpu_custom_call.1']
    #allocation4 [shape = 's32[2]{0}', space=sflag, size = 0x8, scoped, tag = 'scoped memory for tpu_custom_call.1']
    #allocation5 [shape = 'u8[196608]{0}', space=vmem, size = 0x30000, scoped, tag = 'input window, operand 1, single buffered']
    #allocation6 [shape = 's32[1]{0}', space=sflag, size = 0x4, scoped, tag = 'scoped memory for tpu_custom_call.1']
    #allocation7 [shape = 'u8[393216]{0}', space=vmem, size = 0x60000, scoped, tag = 'input window, operand 2, single buffered']
    #allocation8 [shape = 'u8[65536]{0}', space=vmem, size = 0x10000, scoped, tag = 'input window, operand 3, single buffered']
    #allocation9 [shape = 's32[1]{0}', space=sflag, size = 0x4, scoped, tag = 'scoped memory for tpu_custom_call.1']
    #allocation10 [shape = 'u8[8192]{0}', space=vmem, size = 0x2000, scoped, tag = 'input window, operand 4, single buffered']
    #allocation11 [shape = 'u8[32768]{0}', space=vmem, size = 0x8000, scoped, tag = 'output window, operand 0']
    %10 = vsyncpa [#allocation3], 0
    %s11 = scalar_lea.sflag [#allocation3], 1
    %12 = vsyncpa %s11, 0
    %13 = vsyncpa [#allocation6], 0
    %14 = vsyncpa [#allocation9], 0
    %15 = vsyncpa [#allocation4], 0
    %s16 = scalar_lea.sflag [#allocation4], 1
    %17 = vsyncpa %s16, 0
    loop: start=0, step=1, limit=4
    $region2: #{tpu_custom_call.1} parent=1 // loop_pre_header
      _
    $region3: #{tpu_custom_call.1} parent=1 // loop_header
      %s19 = sphi 0, %s23
      %p20 = scmp.ge.s32.totalorder %s19, 4
      %s29 = sphi 0, %s31
      %s32 = sphi 0, %s29
      %s33 = sphi 0, %s32
      %s49 = sphi 0, %s33
      %s53 = sphi 0, %s53
      %s55 = sphi 0, %s53
      %s56 = sphi 0, %s55
      %s70 = sphi 0, %s56
      %s74 = sphi 0, %s74
      %s76 = sphi 0, %s74
      %s77 = sphi 0, %s76
      %s91 = sphi 0, %s77
      %s95 = sphi 0, %s95
      %s97 = sphi 0, %s95
      %s98 = sphi 0, %s97
      %s112 = sphi 0, %s98
      %s116 = sphi 0, %s116
      %s118 = sphi 0, %s116
      %s119 = sphi 0, %s118
      %s133 = sphi 0, %s119
      %s139 = sphi 0, %s141
      %s142 = sphi 0, %s139
      %s143 = sphi 0, %s142
      %s159 = sphi 0, %s143
    $region4: #{tpu_custom_call.1} parent=1 // loop_header_branch
      %22 = sbr.rel (%p20) target = $region8
    $region5: #{tpu_custom_call.1} parent=1 // loop_body
      %s24 = ssub.s32 %s19, 1
      %s25 = ssub.s32 %s19, 2
      %s26 = sadd.s32 %s19, 1
      %s27 = ssub.s32 %s19, %s26
      %p28 = scmp.eq.s32.totalorder %s27, 0
      %s30 = sadd.s32 %s29, 1
      %s31 = scalar_select %p28, %s29, %s30
      %p34 = pneg %p28
      %p35 = scmp.eq.s32.totalorder %s19, 1
      %p36 = por %p34, %p35
      %p37 = scmp.ne.s32.totalorder %s29, %s32
      %p38 = scmp.eq.s32.totalorder %s19, 0
      %p39 = por %p37, %p38
      %p40 = scmp.ne.s32.totalorder %s29, %s32
      %p41 = scmp.eq.s32.totalorder %s24, 1
      %p42 = por %p40, %p41
      %p43 = scmp.ne.s32.totalorder %s32, %s33
      %p44 = scmp.eq.s32.totalorder %s24, 0
      %p45 = por %p43, %p44
      %p46 = scmp.ne.s32.totalorder %s32, %s33
      %p47 = scmp.eq.s32.totalorder %s25, 1
      %p48 = por %p46, %p47
      %p50 = scmp.ne.s32.totalorder %s33, %s49
      %p51 = scmp.eq.s32.totalorder %s25, 0
      %p52 = por %p50, %p51
      %s54 = sadd.s32 %s53, 1
      %p57 = scmp.eq.s32.totalorder %s19, 1
      %p58 = scmp.ne.s32.totalorder %s53, %s55
      %p59 = scmp.eq.s32.totalorder %s19, 0
      %p60 = por %p58, %p59
      %p61 = scmp.ne.s32.totalorder %s53, %s55
      %p62 = scmp.eq.s32.totalorder %s24, 1
      %p63 = por %p61, %p62
      %p64 = scmp.ne.s32.totalorder %s55, %s56
      %p65 = scmp.eq.s32.totalorder %s24, 0
      %p66 = por %p64, %p65
      %p67 = scmp.ne.s32.totalorder %s55, %s56
      %p68 = scmp.eq.s32.totalorder %s25, 1
      %p69 = por %p67, %p68
      %p71 = scmp.ne.s32.totalorder %s56, %s70
      %p72 = scmp.eq.s32.totalorder %s25, 0
      %p73 = por %p71, %p72
      %s75 = sadd.s32 %s74, 1
      %p78 = scmp.eq.s32.totalorder %s19, 1
      %p79 = scmp.ne.s32.totalorder %s74, %s76
      %p80 = scmp.eq.s32.totalorder %s19, 0
      %p81 = por %p79, %p80
      %p82 = scmp.ne.s32.totalorder %s74, %s76
      %p83 = scmp.eq.s32.totalorder %s24, 1
      %p84 = por %p82, %p83
      %p85 = scmp.ne.s32.totalorder %s76, %s77
      %p86 = scmp.eq.s32.totalorder %s24, 0
      %p87 = por %p85, %p86
      %p88 = scmp.ne.s32.totalorder %s76, %s77
      %p89 = scmp.eq.s32.totalorder %s25, 1
      %p90 = por %p88, %p89
      %p92 = scmp.ne.s32.totalorder %s77, %s91
      %p93 = scmp.eq.s32.totalorder %s25, 0
      %p94 = por %p92, %p93
      %s96 = sadd.s32 %s95, 1
      %p99 = scmp.eq.s32.totalorder %s19, 1
      %p100 = scmp.ne.s32.totalorder %s95, %s97
      %p101 = scmp.eq.s32.totalorder %s19, 0
      %p102 = por %p100, %p101
      %p103 = scmp.ne.s32.totalorder %s95, %s97
      %p104 = scmp.eq.s32.totalorder %s24, 1
      %p105 = por %p103, %p104
      %p106 = scmp.ne.s32.totalorder %s97, %s98
      %p107 = scmp.eq.s32.totalorder %s24, 0
      %p108 = por %p106, %p107
      %p109 = scmp.ne.s32.totalorder %s97, %s98
      %p110 = scmp.eq.s32.totalorder %s25, 1
      %p111 = por %p109, %p110
      %p113 = scmp.ne.s32.totalorder %s98, %s112
      %p114 = scmp.eq.s32.totalorder %s25, 0
      %p115 = por %p113, %p114
      %s117 = sadd.s32 %s116, 1
      %p120 = scmp.eq.s32.totalorder %s19, 1
      %p121 = scmp.ne.s32.totalorder %s116, %s118
      %p122 = scmp.eq.s32.totalorder %s19, 0
      %p123 = por %p121, %p122
      %p124 = scmp.ne.s32.totalorder %s116, %s118
      %p125 = scmp.eq.s32.totalorder %s24, 1
      %p126 = por %p124, %p125
      %p127 = scmp.ne.s32.totalorder %s118, %s119
      %p128 = scmp.eq.s32.totalorder %s24, 0
      %p129 = por %p127, %p128
      %p130 = scmp.ne.s32.totalorder %s118, %s119
      %p131 = scmp.eq.s32.totalorder %s25, 1
      %p132 = por %p130, %p131
      %p134 = scmp.ne.s32.totalorder %s119, %s133
      %p135 = scmp.eq.s32.totalorder %s25, 0
      %p136 = por %p134, %p135
      %s137 = ssub.s32 %s19, %s26
      %p138 = scmp.eq.s32.totalorder %s137, 0
      %s140 = sadd.s32 %s139, 1
      %s141 = scalar_select %p138, %s139, %s140
      %p144 = pneg %p138
      %p145 = scmp.eq.s32.totalorder %s19, 1
      %p146 = por %p144, %p145
      %p147 = scmp.ne.s32.totalorder %s139, %s142
      %p148 = scmp.eq.s32.totalorder %s19, 0
      %p149 = por %p147, %p148
      %p150 = scmp.ne.s32.totalorder %s139, %s142
      %p151 = scmp.eq.s32.totalorder %s24, 1
      %p152 = por %p150, %p151
      %p153 = scmp.ne.s32.totalorder %s142, %s143
      %p154 = scmp.eq.s32.totalorder %s24, 0
      %p155 = por %p153, %p154
      %p156 = scmp.ne.s32.totalorder %s142, %s143
      %p157 = scmp.eq.s32.totalorder %s25, 1
      %p158 = por %p156, %p157
      %p160 = scmp.ne.s32.totalorder %s143, %s159
      %p161 = scmp.eq.s32.totalorder %s25, 0
      %p162 = por %p160, %p161
      %p163 = scmp.le.s32.totalorder 1, %s19
      %p164 = scmp.lt.s32.totalorder %s19, 3
      %p165 = pnand %p163, %p164
      %p166 = pneg %p165
      // Predicated region
      $region9: #{tpu_custom_call.1} parent=5 // pred_check
        _
      $region10: #{tpu_custom_call.1} parent=5 // pred_check_branch
        %168 = sbr.rel (%p165) target = $region12
      $region11: #{tpu_custom_call.1} parent=5 // pred_region
        %s169 = ssub.s32 %s19, 1
        // Predicated region
        $region13: #{tpu_custom_call.1} parent=11 // pred_check
          %p170 = pneg %p66
        $region14: #{tpu_custom_call.1} parent=11 // pred_check_branch
          %172 = sbr.rel (%p170) target = $region16
        $region15: #{tpu_custom_call.1} parent=11 // pred_region
          %174 = vsyncadd [#allocation6], 0
          %s175 = sshll.u32 %s1, 4
          %s176 = int_to_ptr.hbm [resolvable:$true] %s175
          %s177 = sshll.u32 [#allocation5], 4
          %s178 = int_to_ptr.vmem [resolvable:$true] %s177
          %183 = dma.hbm_to_vmem [thread:$0]  %s176, 6144, %s178, [#allocation6], 128, 128, 8
        $region16: #{tpu_custom_call.1} parent=11 // pred_fallthru
          _
        // Predicated region
        $region17: #{tpu_custom_call.1} parent=11 // pred_check
          %p184 = pneg %p87
        $region18: #{tpu_custom_call.1} parent=11 // pred_check_branch
          %186 = sbr.rel (%p184) target = $region20
        $region19: #{tpu_custom_call.1} parent=11 // pred_region
          %188 = vsyncadd [#allocation6], 0
          %s189 = sshll.u32 %s2, 4
          %s190 = int_to_ptr.hbm [resolvable:$true] %s189
          %s191 = sshll.u32 [#allocation7], 4
          %s192 = int_to_ptr.vmem [resolvable:$true] %s191
          %197 = dma.hbm_to_vmem [thread:$0]  %s190, 12288, %s192, [#allocation6], 128, 128, 8
        $region20: #{tpu_custom_call.1} parent=11 // pred_fallthru
          _
        // Predicated region
        $region21: #{tpu_custom_call.1} parent=11 // pred_check
          %p198 = pneg %p108
        $region22: #{tpu_custom_call.1} parent=11 // pred_check_branch
          %200 = sbr.rel (%p198) target = $region24
        $region23: #{tpu_custom_call.1} parent=11 // pred_region
          %202 = vsyncadd [#allocation9], 0
          %s203 = sshll.u32 %s3, 4
          %s204 = int_to_ptr.hbm [resolvable:$true] %s203
          %s205 = sshll.u32 [#allocation8], 4
          %s206 = int_to_ptr.vmem [resolvable:$true] %s205
          %211 = dma.hbm_to_vmem [thread:$0]  %s204, 2048, %s206, [#allocation9], 128, 128, 8
        $region24: #{tpu_custom_call.1} parent=11 // pred_fallthru
          _
        // Predicated region
        $region25: #{tpu_custom_call.1} parent=11 // pred_check
          %p212 = pneg %p129
        $region26: #{tpu_custom_call.1} parent=11 // pred_check_branch
          %214 = sbr.rel (%p212) target = $region28
        $region27: #{tpu_custom_call.1} parent=11 // pred_region
          %216 = vsyncadd [#allocation9], 0
          %s218 = sshll.u32 %s4, 4
          %s219 = int_to_ptr.hbm [resolvable:$true] %s218
          %s220 = sshll.u32 [#allocation10], 4
          %s221 = int_to_ptr.vmem [resolvable:$true] %s220
          %223 = dma.hbm_to_vmem [thread:$0]  %s219, 256, %s221, [#allocation9]
        $region28: #{tpu_custom_call.1} parent=11 // pred_fallthru
          _
      $region12: #{tpu_custom_call.1} parent=5 // pred_fallthru
        _
      %p224 = scmp.lt.s32.totalorder %s19, 2
      // Predicated region
      $region29: #{tpu_custom_call.1} parent=5 // pred_check
        %p225 = pneg %p224
      $region30: #{tpu_custom_call.1} parent=5 // pred_check_branch
        %227 = sbr.rel (%p225) target = $region32
      $region31: #{tpu_custom_call.1} parent=5 // pred_region
        // Predicated region
        $region33: #{tpu_custom_call.1} parent=31 // pred_check
          %p228 = pneg %p39
        $region34: #{tpu_custom_call.1} parent=31 // pred_check_branch
          %230 = sbr.rel (%p228) target = $region36
        $region35: #{tpu_custom_call.1} parent=31 // pred_region
          %s231 = sand.u32 %s29, 1
          %s232 = scalar_lea.sflag [#allocation3], %s231
          %s233 = sand.u32 %s29, 1
          %s234 = smul.addr %s233, 8
          %s235 = scalar_lea.vmem [#allocation2], %s234
          %237 = vsyncadd %s232, 0
          %s238 = smul.addr %s19, 2
          %s239 = smul.addr %s238, 4
          %s240 = scalar_lea.hbm %s0, %s239
          %s241 = sshll.u32 %s240, 4
          %s242 = int_to_ptr.hbm [resolvable:$true] %s241
          %s243 = sshll.u32 %s235, 4
          %s244 = int_to_ptr.vmem [resolvable:$true] %s243
          %249 = dma.hbm_to_vmem [thread:$0]  %s242, 128, %s244, %s232, 64, 64, 4
        $region36: #{tpu_custom_call.1} parent=31 // pred_fallthru
          _
      $region32: #{tpu_custom_call.1} parent=5 // pred_fallthru
        _
      %p250 = scmp.le.s32.totalorder 1, %s19
      %p251 = scmp.lt.s32.totalorder %s19, 3
      %p252 = pnand %p250, %p251
      %p253 = pneg %p252
      // Predicated region
      $region37: #{tpu_custom_call.1} parent=5 // pred_check
        _
      $region38: #{tpu_custom_call.1} parent=5 // pred_check_branch
        %255 = sbr.rel (%p252) target = $region40
      $region39: #{tpu_custom_call.1} parent=5 // pred_region
        %s256 = ssub.s32 %s19, 1
        %s257 = sand.u32 %s32, 1
        %s258 = scalar_lea.sflag [#allocation3], %s257
        %s259 = sand.u32 %s32, 1
        %s260 = smul.addr %s259, 8
        %s261 = scalar_lea.vmem [#allocation2], %s260
        // Predicated region
        $region41: #{tpu_custom_call.1} parent=39 // pred_check
          %p262 = pneg %p45
        $region42: #{tpu_custom_call.1} parent=39 // pred_check_branch
          %264 = sbr.rel (%p262) target = $region44
        $region43: #{tpu_custom_call.1} parent=39 // pred_region
          %266 = dma.done %s258, 128
        $region44: #{tpu_custom_call.1} parent=39 // pred_fallthru
          _
        // Predicated region
        $region45: #{tpu_custom_call.1} parent=39 // pred_check
          %p267 = pneg %p66
        $region46: #{tpu_custom_call.1} parent=39 // pred_check_branch
          %269 = sbr.rel (%p267) target = $region48
        $region47: #{tpu_custom_call.1} parent=39 // pred_region
          %271 = dma.done [#allocation6], 6144
        $region48: #{tpu_custom_call.1} parent=39 // pred_fallthru
          _
        // Predicated region
        $region49: #{tpu_custom_call.1} parent=39 // pred_check
          %p272 = pneg %p87
        $region50: #{tpu_custom_call.1} parent=39 // pred_check_branch
          %274 = sbr.rel (%p272) target = $region52
        $region51: #{tpu_custom_call.1} parent=39 // pred_region
          %276 = dma.done [#allocation6], 12288
        $region52: #{tpu_custom_call.1} parent=39 // pred_fallthru
          _
        // Predicated region
        $region53: #{tpu_custom_call.1} parent=39 // pred_check
          %p277 = pneg %p108
        $region54: #{tpu_custom_call.1} parent=39 // pred_check_branch
          %279 = sbr.rel (%p277) target = $region56
        $region55: #{tpu_custom_call.1} parent=39 // pred_region
          %281 = dma.done [#allocation9], 2048
        $region56: #{tpu_custom_call.1} parent=39 // pred_fallthru
          _
        // Predicated region
        $region57: #{tpu_custom_call.1} parent=39 // pred_check
          %p282 = pneg %p129
        $region58: #{tpu_custom_call.1} parent=39 // pred_check_branch
          %284 = sbr.rel (%p282) target = $region60
        $region59: #{tpu_custom_call.1} parent=39 // pred_region
          %286 = dma.done [#allocation9], 256
        $region60: #{tpu_custom_call.1} parent=39 // pred_fallthru
          _
        %s287 = sand.u32 %s32, 1
        %s288 = scalar_lea.sflag [#allocation3], %s287
        %s289 = sand.u32 %s32, 1
        %s290 = smul.addr %s289, 8
        %s291 = scalar_lea.vmem [#allocation2], %s290
        %p292 = pneg %p45
        %p293 = pneg %p42
        %p294 = pneg %p66
        %p295 = pneg %p63
        %p296 = pneg %p87
        %p297 = pneg %p84
        %p298 = pneg %p108
        %p299 = pneg %p105
        %p300 = pneg %p129
        %p301 = pneg %p126
        %p302 = pneg %p155
        %p303 = pneg %p152
        %s304 = sand.u32 %s142, 1
        %s305 = scalar_lea.sflag [#allocation4], %s304
        %s306 = sand.u32 %s142, 1
        %s307 = smul.addr %s306, 32
        %s308 = scalar_lea.vmem [#allocation11], %s307
        %v310 = vld [vmem:[%s261] sm:$0xf]
        %v311 = vld [vmem:[%s261 + $0x4] sm:$0xf]
        %v312 = vld [vmem:[#allocation10] sm:$0x3f]
        %v313 = vld [vmem:[#allocation10 + $0x8] sm:$0x3f]
        %v316 = vunpack.c.l.b16 %v310
        %v317 = vunpack.c.l.b16 %v311
        %v318 = vpack.c.b16 %v317, %v316
        %v320 = vshrl.u32 %v318, 16
        %v322 = vrot.slane %v320, 7
        %v323 = vshll.u32 %v318, 16
        %v325 = vor.u32 %v322, %v323
        %vm327 = vcmask 1040384
        %vm328 = vsmask.f32 256
        %vm329 = vmand %vm327, %vm328
        %v330 = vsel %vm329, 0, %v325
        %v331 = vrot.slane %v323, 1
        %v332 = vor.u32 %v320, %v331
        %vm334 = vcmask 1047552
        %vm335 = vsmask.f32 7424
        %vm336 = vmand %vm334, %vm335
        %v337 = vsel %vm336, %v332, 0
        %v339 = vld [vmem:[#allocation5] sm:$0xff]
        %v340 = vld [vmem:[#allocation5 + $0x8] sm:$0xff]
        %v341 = vld [vmem:[#allocation5 + $0x10] sm:$0xff]
        %v342 = vld [vmem:[#allocation5 + $0x18] sm:$0xff]
        %v343 = vld [vmem:[#allocation5 + $0x20] sm:$0xff]
        %v344 = vld [vmem:[#allocation5 + $0x28] sm:$0xff]
        %v345 = vld [vmem:[#allocation5 + $0x30] sm:$0xff]
        %v346 = vld [vmem:[#allocation5 + $0x38] sm:$0xff]
        %v347 = vld [vmem:[#allocation5 + $0x40] sm:$0xff]
        %v348 = vld [vmem:[#allocation5 + $0x48] sm:$0xff]
        %v349 = vld [vmem:[#allocation5 + $0x50] sm:$0xff]
        %v350 = vld [vmem:[#allocation5 + $0x58] sm:$0xff]
        %v351 = vld [vmem:[#allocation5 + $0x60] sm:$0xff]
        %v352 = vld [vmem:[#allocation5 + $0x68] sm:$0xff]
        %v353 = vld [vmem:[#allocation5 + $0x70] sm:$0xff]
        %v354 = vld [vmem:[#allocation5 + $0x78] sm:$0xff]
        %v355 = vld [vmem:[#allocation5 + $0x80] sm:$0xff]
        %v356 = vld [vmem:[#allocation5 + $0x88] sm:$0xff]
        %v357 = vld [vmem:[#allocation5 + $0x90] sm:$0xff]
        %v358 = vld [vmem:[#allocation5 + $0x98] sm:$0xff]
        %v359 = vld [vmem:[#allocation5 + $0xa0] sm:$0xff]
        %v360 = vld [vmem:[#allocation5 + $0xa8] sm:$0xff]
        %v361 = vld [vmem:[#allocation5 + $0xb0] sm:$0xff]
        %v362 = vld [vmem:[#allocation5 + $0xb8] sm:$0xff]
        %v363 = vld [vmem:[#allocation5 + $0xc0] sm:$0xff]
        %v364 = vld [vmem:[#allocation5 + $0xc8] sm:$0xff]
        %v365 = vld [vmem:[#allocation5 + $0xd0] sm:$0xff]
        %v366 = vld [vmem:[#allocation5 + $0xd8] sm:$0xff]
        %v367 = vld [vmem:[#allocation5 + $0xe0] sm:$0xff]
        %v368 = vld [vmem:[#allocation5 + $0xe8] sm:$0xff]
        %v369 = vld [vmem:[#allocation5 + $0xf0] sm:$0xff]
        %v370 = vld [vmem:[#allocation5 + $0xf8] sm:$0xff]
        %v371 = vld [vmem:[#allocation5 + $0x100] sm:$0xff]
        %v372 = vld [vmem:[#allocation5 + $0x108] sm:$0xff]
        %v373 = vld [vmem:[#allocation5 + $0x110] sm:$0xff]
        %v374 = vld [vmem:[#allocation5 + $0x118] sm:$0xff]
        %v375 = vld [vmem:[#allocation5 + $0x120] sm:$0xff]
        %v376 = vld [vmem:[#allocation5 + $0x128] sm:$0xff]
        %v377 = vld [vmem:[#allocation5 + $0x130] sm:$0xff]
        %v378 = vld [vmem:[#allocation5 + $0x138] sm:$0xff]
        %v379 = vld [vmem:[#allocation5 + $0x140] sm:$0xff]
        %v380 = vld [vmem:[#allocation5 + $0x148] sm:$0xff]
        %v381 = vld [vmem:[#allocation5 + $0x150] sm:$0xff]
        %v382 = vld [vmem:[#allocation5 + $0x158] sm:$0xff]
        %v383 = vld [vmem:[#allocation5 + $0x160] sm:$0xff]
        %v384 = vld [vmem:[#allocation5 + $0x168] sm:$0xff]
        %v385 = vld [vmem:[#allocation5 + $0x170] sm:$0xff]
        %v386 = vld [vmem:[#allocation5 + $0x178] sm:$0xff]
        %v435 = vunpack.c.l.b16 %v339
        %v436 = vunpack.c.h.b16 %v339
        %v437 = vunpack.c.l.b16 %v340
        %v438 = vunpack.c.h.b16 %v340
        %v439 = vunpack.c.l.b16 %v341
        %v440 = vunpack.c.h.b16 %v341
        %v441 = vunpack.c.l.b16 %v342
        %v442 = vunpack.c.h.b16 %v342
        %v443 = vunpack.c.l.b16 %v343
        %v444 = vunpack.c.h.b16 %v343
        %v445 = vunpack.c.l.b16 %v344
        %v446 = vunpack.c.h.b16 %v344
        %v447 = vunpack.c.l.b16 %v345
        %v448 = vunpack.c.h.b16 %v345
        %v449 = vunpack.c.l.b16 %v346
        %v450 = vunpack.c.h.b16 %v346
        %v451 = vunpack.c.l.b16 %v347
        %v452 = vunpack.c.h.b16 %v347
        %v453 = vunpack.c.l.b16 %v348
        %v454 = vunpack.c.h.b16 %v348
        %v455 = vunpack.c.l.b16 %v349
        %v456 = vunpack.c.h.b16 %v349
        %v457 = vunpack.c.l.b16 %v350
        %v458 = vunpack.c.h.b16 %v350
        %v459 = vunpack.c.l.b16 %v351
        %v460 = vunpack.c.h.b16 %v351
        %v461 = vunpack.c.l.b16 %v352
        %v462 = vunpack.c.h.b16 %v352
        %v463 = vunpack.c.l.b16 %v353
        %v464 = vunpack.c.h.b16 %v353
        %v465 = vunpack.c.l.b16 %v354
        %v466 = vunpack.c.h.b16 %v354
        %v467 = vunpack.c.l.b16 %v355
        %v468 = vunpack.c.h.b16 %v355
        %v469 = vunpack.c.l.b16 %v356
        %v470 = vunpack.c.h.b16 %v356
        %v471 = vunpack.c.l.b16 %v357
        %v472 = vunpack.c.h.b16 %v357
        %v473 = vunpack.c.l.b16 %v358
        %v474 = vunpack.c.h.b16 %v358
        %v475 = vunpack.c.l.b16 %v359
        %v476 = vunpack.c.h.b16 %v359
        %v477 = vunpack.c.l.b16 %v360
        %v478 = vunpack.c.h.b16 %v360
        %v479 = vunpack.c.l.b16 %v361
        %v480 = vunpack.c.h.b16 %v361
        %v481 = vunpack.c.l.b16 %v362
        %v482 = vunpack.c.h.b16 %v362
        %v483 = vunpack.c.l.b16 %v363
        %v484 = vunpack.c.h.b16 %v363
        %v485 = vunpack.c.l.b16 %v364
        %v486 = vunpack.c.h.b16 %v364
        %v487 = vunpack.c.l.b16 %v365
        %v488 = vunpack.c.h.b16 %v365
        %v489 = vunpack.c.l.b16 %v366
        %v490 = vunpack.c.h.b16 %v366
        %v491 = vunpack.c.l.b16 %v367
        %v492 = vunpack.c.h.b16 %v367
        %v493 = vunpack.c.l.b16 %v368
        %v494 = vunpack.c.h.b16 %v368
        %v495 = vunpack.c.l.b16 %v369
        %v496 = vunpack.c.h.b16 %v369
        %v497 = vunpack.c.l.b16 %v370
        %v498 = vunpack.c.h.b16 %v370
        %v499 = vunpack.c.l.b16 %v371
        %v500 = vunpack.c.h.b16 %v371
        %v501 = vunpack.c.l.b16 %v372
        %v502 = vunpack.c.h.b16 %v372
        %v503 = vunpack.c.l.b16 %v373
        %v504 = vunpack.c.h.b16 %v373
        %v505 = vunpack.c.l.b16 %v374
        %v506 = vunpack.c.h.b16 %v374
        %v507 = vunpack.c.l.b16 %v375
        %v508 = vunpack.c.h.b16 %v375
        %v509 = vunpack.c.l.b16 %v376
        %v510 = vunpack.c.h.b16 %v376
        %v511 = vunpack.c.l.b16 %v377
        %v512 = vunpack.c.h.b16 %v377
        %v513 = vunpack.c.l.b16 %v378
        %v514 = vunpack.c.h.b16 %v378
        %v515 = vunpack.c.l.b16 %v379
        %v516 = vunpack.c.h.b16 %v379
        %v517 = vunpack.c.l.b16 %v380
        %v518 = vunpack.c.h.b16 %v380
        %v519 = vunpack.c.l.b16 %v381
        %v520 = vunpack.c.h.b16 %v381
        %v521 = vunpack.c.l.b16 %v382
        %v522 = vunpack.c.h.b16 %v382
        %v523 = vunpack.c.l.b16 %v383
        %v524 = vunpack.c.h.b16 %v383
        %v525 = vunpack.c.l.b16 %v384
        %v526 = vunpack.c.h.b16 %v384
        %v527 = vunpack.c.l.b16 %v385
        %v528 = vunpack.c.h.b16 %v385
        %v529 = vunpack.c.l.b16 %v386
        %v530 = vunpack.c.h.b16 %v386
        %v531 = vpack.c.b16 %v437, %v435
        %v532 = vpack.c.b16 %v438, %v436
        %v533 = vpack.c.b16 %v441, %v439
        %v534 = vpack.c.b16 %v442, %v440
        %v535 = vpack.c.b16 %v445, %v443
        %v536 = vpack.c.b16 %v446, %v444
        %v537 = vpack.c.b16 %v449, %v447
        %v538 = vpack.c.b16 %v450, %v448
        %v539 = vpack.c.b16 %v453, %v451
        %v540 = vpack.c.b16 %v454, %v452
        %v541 = vpack.c.b16 %v457, %v455
        %v542 = vpack.c.b16 %v458, %v456
        %v543 = vpack.c.b16 %v461, %v459
        %v544 = vpack.c.b16 %v462, %v460
        %v545 = vpack.c.b16 %v465, %v463
        %v546 = vpack.c.b16 %v466, %v464
        %v547 = vpack.c.b16 %v469, %v467
        %v548 = vpack.c.b16 %v470, %v468
        %v549 = vpack.c.b16 %v473, %v471
        %v550 = vpack.c.b16 %v474, %v472
        %v551 = vpack.c.b16 %v477, %v475
        %v552 = vpack.c.b16 %v478, %v476
        %v553 = vpack.c.b16 %v481, %v479
        %v554 = vpack.c.b16 %v482, %v480
        %v555 = vpack.c.b16 %v485, %v483
        %v556 = vpack.c.b16 %v486, %v484
        %v557 = vpack.c.b16 %v489, %v487
        %v558 = vpack.c.b16 %v490, %v488
        %v559 = vpack.c.b16 %v493, %v491
        %v560 = vpack.c.b16 %v494, %v492
        %v561 = vpack.c.b16 %v497, %v495
        %v562 = vpack.c.b16 %v498, %v496
        %v563 = vpack.c.b16 %v501, %v499
        %v564 = vpack.c.b16 %v502, %v500
        %v565 = vpack.c.b16 %v505, %v503
        %v566 = vpack.c.b16 %v506, %v504
        %v567 = vpack.c.b16 %v509, %v507
        %v568 = vpack.c.b16 %v510, %v508
        %v569 = vpack.c.b16 %v513, %v511
        %v570 = vpack.c.b16 %v514, %v512
        %v571 = vpack.c.b16 %v517, %v515
        %v572 = vpack.c.b16 %v518, %v516
        %v573 = vpack.c.b16 %v521, %v519
        %v574 = vpack.c.b16 %v522, %v520
        %v575 = vpack.c.b16 %v525, %v523
        %v576 = vpack.c.b16 %v526, %v524
        %v577 = vpack.c.b16 %v529, %v527
        %v578 = vpack.c.b16 %v530, %v528
        %627 = vmatpush.bf16.msra.mxu0 %v545
        %628 = vmatpush.bf16.msra.mxu0 %v543
        %629 = vmatpush.bf16.msra.mxu0 %v541
        %630 = vmatpush.bf16.msra.mxu0 %v539
        %631 = vmatpush.bf16.msra.mxu0 %v537
        %632 = vmatpush.bf16.msra.mxu0 %v535
        %633 = vmatpush.bf16.msra.mxu0 %v533
        %634 = vmatpush.bf16.msra.mxu0 %v531
        %635 = vmatmul.bf16.gmra.mxu0 %v330
        %v636 = vpop.f32.mrf.mxu0
        %v637 = vadd.f32 0.0, %v636
        %v638 = vpop.f32.mrf.mxu0
        %v639 = vadd.f32 0.0, %v638
        %640 = vdwg.mxu0
        %641 = vmatpush.bf16.msra.mxu0 %v561
        %642 = vmatpush.bf16.msra.mxu0 %v559
        %643 = vmatpush.bf16.msra.mxu0 %v557
        %644 = vmatpush.bf16.msra.mxu0 %v555
        %645 = vmatpush.bf16.msra.mxu0 %v553
        %646 = vmatpush.bf16.msra.mxu0 %v551
        %647 = vmatpush.bf16.msra.mxu0 %v549
        %648 = vmatpush.bf16.msra.mxu0 %v547
        %649 = vmatmul.bf16.gmra.mxu0 %v318
        %v650 = vpop.f32.mrf.mxu0
        %v651 = vadd.f32 %v637, %v650
        %v652 = vpop.f32.mrf.mxu0
        %v653 = vadd.f32 %v639, %v652
        %654 = vdwg.mxu0
        %655 = vmatpush.bf16.msra.mxu0 %v577
        %656 = vmatpush.bf16.msra.mxu0 %v575
        %657 = vmatpush.bf16.msra.mxu0 %v573
        %658 = vmatpush.bf16.msra.mxu0 %v571
        %659 = vmatpush.bf16.msra.mxu0 %v569
        %660 = vmatpush.bf16.msra.mxu0 %v567
        %661 = vmatpush.bf16.msra.mxu0 %v565
        %662 = vmatpush.bf16.msra.mxu0 %v563
        %663 = vmatmul.bf16.gmra.mxu0 %v337
        %v664 = vpop.f32.mrf.mxu0
        %v665 = vadd.f32 %v651, %v664
        %v666 = vpop.f32.mrf.mxu0
        %v667 = vadd.f32 %v653, %v666
        %668 = vdwg.mxu0
        %669 = vmatpush.bf16.msra.mxu0 %v546
        %670 = vmatpush.bf16.msra.mxu0 %v544
        %671 = vmatpush.bf16.msra.mxu0 %v542
        %672 = vmatpush.bf16.msra.mxu0 %v540
        %673 = vmatpush.bf16.msra.mxu0 %v538
        %674 = vmatpush.bf16.msra.mxu0 %v536
        %675 = vmatpush.bf16.msra.mxu0 %v534
        %676 = vmatpush.bf16.msra.mxu0 %v532
        %677 = vmatmul.bf16.gmra.mxu0 %v330
        %v678 = vpop.f32.mrf.mxu0
        %v679 = vadd.f32 0.0, %v678
        %v680 = vpop.f32.mrf.mxu0
        %v681 = vadd.f32 0.0, %v680
        %682 = vdwg.mxu0
        %683 = vmatpush.bf16.msra.mxu0 %v562
        %684 = vmatpush.bf16.msra.mxu0 %v560
        %685 = vmatpush.bf16.msra.mxu0 %v558
        %686 = vmatpush.bf16.msra.mxu0 %v556
        %687 = vmatpush.bf16.msra.mxu0 %v554
        %688 = vmatpush.bf16.msra.mxu0 %v552
        %689 = vmatpush.bf16.msra.mxu0 %v550
        %690 = vmatpush.bf16.msra.mxu0 %v548
        %691 = vmatmul.bf16.gmra.mxu0 %v318
        %v692 = vpop.f32.mrf.mxu0
        %v693 = vadd.f32 %v679, %v692
        %v694 = vpop.f32.mrf.mxu0
        %v695 = vadd.f32 %v681, %v694
        %696 = vdwg.mxu0
        %697 = vmatpush.bf16.msra.mxu0 %v578
        %698 = vmatpush.bf16.msra.mxu0 %v576
        %699 = vmatpush.bf16.msra.mxu0 %v574
        %700 = vmatpush.bf16.msra.mxu0 %v572
        %701 = vmatpush.bf16.msra.mxu0 %v570
        %702 = vmatpush.bf16.msra.mxu0 %v568
        %703 = vmatpush.bf16.msra.mxu0 %v566
        %704 = vmatpush.bf16.msra.mxu0 %v564
        %705 = vmatmul.bf16.gmra.mxu0 %v337
        %v706 = vpop.f32.mrf.mxu0
        %v707 = vadd.f32 %v693, %v706
        %v708 = vpop.f32.mrf.mxu0
        %v709 = vadd.f32 %v695, %v708
        %710 = vdwg.mxu0
        %v711 = vperm.slane %v312, 0
        %v712 = vperm.slane %v313, 0
        %v713 = vmul.f32 %v665, %v711
        %v714 = vmul.f32 %v707, %v712
        %v715 = vmul.f32 %v667, %v711
        %v716 = vmul.f32 %v709, %v712
        %v717 = vperm.slane %v312, 1
        %v718 = vperm.slane %v313, 1
        %v719 = vadd.f32 %v713, %v717
        %v720 = vadd.f32 %v714, %v718
        %v721 = vadd.f32 %v715, %v717
        %v722 = vadd.f32 %v716, %v718
        %v723 = vmax.f32 %v719, 0.0
        %v724 = vmax.f32 %v720, 0.0
        %v725 = vmax.f32 %v721, 0.0
        %v726 = vmax.f32 %v722, 0.0
        %v727 = vpack.c.bf16 %v724, %v723
        %v728 = vpack.c.bf16 %v726, %v725
        %v731 = vunpack.c.l.b16 %v727
        %v732 = vunpack.c.h.b16 %v727
        %v733 = vunpack.c.l.b16 %v728
        %v734 = vunpack.c.h.b16 %v728
        %v735 = vpack.c.b16 %v733, %v731
        %v736 = vpack.c.b16 %v734, %v732
        %v738 = vshrl.u32 %v735, 16
        %v740 = vrot.slane %v738, 7
        %v741 = vshll.u32 %v735, 16
        %v743 = vor.u32 %v740, %v741
        %v745 = vshrl.u32 %v736, 16
        %v747 = vrot.slane %v745, 7
        %v748 = vshll.u32 %v736, 16
        %v750 = vor.u32 %v747, %v748
        %v753 = vsel %vm329, 0, %v743
        %v754 = vsel %vm329, 0, %v750
        %v755 = vrot.slane %v741, 1
        %v756 = vor.u32 %v738, %v755
        %v757 = vrot.slane %v748, 1
        %v758 = vor.u32 %v745, %v757
        %v761 = vsel %vm336, %v756, 0
        %v762 = vsel %vm336, %v758, 0
        %v765 = vld [vmem:[#allocation7] sm:$0xff]
        %v766 = vld [vmem:[#allocation7 + $0x8] sm:$0xff]
        %v767 = vld [vmem:[#allocation7 + $0x10] sm:$0xff]
        %v768 = vld [vmem:[#allocation7 + $0x18] sm:$0xff]
        %v769 = vld [vmem:[#allocation7 + $0x20] sm:$0xff]
        %v770 = vld [vmem:[#allocation7 + $0x28] sm:$0xff]
        %v771 = vld [vmem:[#allocation7 + $0x30] sm:$0xff]
        %v772 = vld [vmem:[#allocation7 + $0x38] sm:$0xff]
        %v773 = vld [vmem:[#allocation7 + $0x40] sm:$0xff]
        %v774 = vld [vmem:[#allocation7 + $0x48] sm:$0xff]
        %v775 = vld [vmem:[#allocation7 + $0x50] sm:$0xff]
        %v776 = vld [vmem:[#allocation7 + $0x58] sm:$0xff]
        %v777 = vld [vmem:[#allocation7 + $0x60] sm:$0xff]
        %v778 = vld [vmem:[#allocation7 + $0x68] sm:$0xff]
        %v779 = vld [vmem:[#allocation7 + $0x70] sm:$0xff]
        %v780 = vld [vmem:[#allocation7 + $0x78] sm:$0xff]
        %v781 = vld [vmem:[#allocation7 + $0x80] sm:$0xff]
        %v782 = vld [vmem:[#allocation7 + $0x88] sm:$0xff]
        %v783 = vld [vmem:[#allocation7 + $0x90] sm:$0xff]
        %v784 = vld [vmem:[#allocation7 + $0x98] sm:$0xff]
        %v785 = vld [vmem:[#allocation7 + $0xa0] sm:$0xff]
        %v786 = vld [vmem:[#allocation7 + $0xa8] sm:$0xff]
        %v787 = vld [vmem:[#allocation7 + $0xb0] sm:$0xff]
        %v788 = vld [vmem:[#allocation7 + $0xb8] sm:$0xff]
        %v789 = vld [vmem:[#allocation7 + $0xc0] sm:$0xff]
        %v790 = vld [vmem:[#allocation7 + $0xc8] sm:$0xff]
        %v791 = vld [vmem:[#allocation7 + $0xd0] sm:$0xff]
        %v792 = vld [vmem:[#allocation7 + $0xd8] sm:$0xff]
        %v793 = vld [vmem:[#allocation7 + $0xe0] sm:$0xff]
        %v794 = vld [vmem:[#allocation7 + $0xe8] sm:$0xff]
        %v795 = vld [vmem:[#allocation7 + $0xf0] sm:$0xff]
        %v796 = vld [vmem:[#allocation7 + $0xf8] sm:$0xff]
        %v797 = vld [vmem:[#allocation7 + $0x100] sm:$0xff]
        %v798 = vld [vmem:[#allocation7 + $0x108] sm:$0xff]
        %v799 = vld [vmem:[#allocation7 + $0x110] sm:$0xff]
        %v800 = vld [vmem:[#allocation7 + $0x118] sm:$0xff]
        %v801 = vld [vmem:[#allocation7 + $0x120] sm:$0xff]
        %v802 = vld [vmem:[#allocation7 + $0x128] sm:$0xff]
        %v803 = vld [vmem:[#allocation7 + $0x130] sm:$0xff]
        %v804 = vld [vmem:[#allocation7 + $0x138] sm:$0xff]
        %v805 = vld [vmem:[#allocation7 + $0x140] sm:$0xff]
        %v806 = vld [vmem:[#allocation7 + $0x148] sm:$0xff]
        %v807 = vld [vmem:[#allocation7 + $0x150] sm:$0xff]
        %v808 = vld [vmem:[#allocation7 + $0x158] sm:$0xff]
        %v809 = vld [vmem:[#allocation7 + $0x160] sm:$0xff]
        %v810 = vld [vmem:[#allocation7 + $0x168] sm:$0xff]
        %v811 = vld [vmem:[#allocation7 + $0x170] sm:$0xff]
        %v812 = vld [vmem:[#allocation7 + $0x178] sm:$0xff]
        %v813 = vld [vmem:[#allocation7 + $0x180] sm:$0xff]
        %v814 = vld [vmem:[#allocation7 + $0x188] sm:$0xff]
        %v815 = vld [vmem:[#allocation7 + $0x190] sm:$0xff]
        %v816 = vld [vmem:[#allocation7 + $0x198] sm:$0xff]
        %v817 = vld [vmem:[#allocation7 + $0x1a0] sm:$0xff]
        %v818 = vld [vmem:[#allocation7 + $0x1a8] sm:$0xff]
        %v819 = vld [vmem:[#allocation7 + $0x1b0] sm:$0xff]
        %v820 = vld [vmem:[#allocation7 + $0x1b8] sm:$0xff]
        %v821 = vld [vmem:[#allocation7 + $0x1c0] sm:$0xff]
        %v822 = vld [vmem:[#allocation7 + $0x1c8] sm:$0xff]
        %v823 = vld [vmem:[#allocation7 + $0x1d0] sm:$0xff]
        %v824 = vld [vmem:[#allocation7 + $0x1d8] sm:$0xff]
        %v825 = vld [vmem:[#allocation7 + $0x1e0] sm:$0xff]
        %v826 = vld [vmem:[#allocation7 + $0x1e8] sm:$0xff]
        %v827 = vld [vmem:[#allocation7 + $0x1f0] sm:$0xff]
        %v828 = vld [vmem:[#allocation7 + $0x1f8] sm:$0xff]
        %v829 = vld [vmem:[#allocation7 + $0x200] sm:$0xff]
        %v830 = vld [vmem:[#allocation7 + $0x208] sm:$0xff]
        %v831 = vld [vmem:[#allocation7 + $0x210] sm:$0xff]
        %v832 = vld [vmem:[#allocation7 + $0x218] sm:$0xff]
        %v833 = vld [vmem:[#allocation7 + $0x220] sm:$0xff]
        %v834 = vld [vmem:[#allocation7 + $0x228] sm:$0xff]
        %v835 = vld [vmem:[#allocation7 + $0x230] sm:$0xff]
        %v836 = vld [vmem:[#allocation7 + $0x238] sm:$0xff]
        %v837 = vld [vmem:[#allocation7 + $0x240] sm:$0xff]
        %v838 = vld [vmem:[#allocation7 + $0x248] sm:$0xff]
        %v839 = vld [vmem:[#allocation7 + $0x250] sm:$0xff]
        %v840 = vld [vmem:[#allocation7 + $0x258] sm:$0xff]
        %v841 = vld [vmem:[#allocation7 + $0x260] sm:$0xff]
        %v842 = vld [vmem:[#allocation7 + $0x268] sm:$0xff]
        %v843 = vld [vmem:[#allocation7 + $0x270] sm:$0xff]
        %v844 = vld [vmem:[#allocation7 + $0x278] sm:$0xff]
        %v845 = vld [vmem:[#allocation7 + $0x280] sm:$0xff]
        %v846 = vld [vmem:[#allocation7 + $0x288] sm:$0xff]
        %v847 = vld [vmem:[#allocation7 + $0x290] sm:$0xff]
        %v848 = vld [vmem:[#allocation7 + $0x298] sm:$0xff]
        %v849 = vld [vmem:[#allocation7 + $0x2a0] sm:$0xff]
        %v850 = vld [vmem:[#allocation7 + $0x2a8] sm:$0xff]
        %v851 = vld [vmem:[#allocation7 + $0x2b0] sm:$0xff]
        %v852 = vld [vmem:[#allocation7 + $0x2b8] sm:$0xff]
        %v853 = vld [vmem:[#allocation7 + $0x2c0] sm:$0xff]
        %v854 = vld [vmem:[#allocation7 + $0x2c8] sm:$0xff]
        %v855 = vld [vmem:[#allocation7 + $0x2d0] sm:$0xff]
        %v856 = vld [vmem:[#allocation7 + $0x2d8] sm:$0xff]
        %v857 = vld [vmem:[#allocation7 + $0x2e0] sm:$0xff]
        %v858 = vld [vmem:[#allocation7 + $0x2e8] sm:$0xff]
        %v859 = vld [vmem:[#allocation7 + $0x2f0] sm:$0xff]
        %v860 = vld [vmem:[#allocation7 + $0x2f8] sm:$0xff]
        %v957 = vunpack.c.l.b16 %v765
        %v958 = vunpack.c.h.b16 %v765
        %v959 = vunpack.c.l.b16 %v766
        %v960 = vunpack.c.h.b16 %v766
        %v961 = vunpack.c.l.b16 %v767
        %v962 = vunpack.c.h.b16 %v767
        %v963 = vunpack.c.l.b16 %v768
        %v964 = vunpack.c.h.b16 %v768
        %v965 = vunpack.c.l.b16 %v769
        %v966 = vunpack.c.h.b16 %v769
        %v967 = vunpack.c.l.b16 %v770
        %v968 = vunpack.c.h.b16 %v770
        %v969 = vunpack.c.l.b16 %v771
        %v970 = vunpack.c.h.b16 %v771
        %v971 = vunpack.c.l.b16 %v772
        %v972 = vunpack.c.h.b16 %v772
        %v973 = vunpack.c.l.b16 %v773
        %v974 = vunpack.c.h.b16 %v773
        %v975 = vunpack.c.l.b16 %v774
        %v976 = vunpack.c.h.b16 %v774
        %v977 = vunpack.c.l.b16 %v775
        %v978 = vunpack.c.h.b16 %v775
        %v979 = vunpack.c.l.b16 %v776
        %v980 = vunpack.c.h.b16 %v776
        %v981 = vunpack.c.l.b16 %v777
        %v982 = vunpack.c.h.b16 %v777
        %v983 = vunpack.c.l.b16 %v778
        %v984 = vunpack.c.h.b16 %v778
        %v985 = vunpack.c.l.b16 %v779
        %v986 = vunpack.c.h.b16 %v779
        %v987 = vunpack.c.l.b16 %v780
        %v988 = vunpack.c.h.b16 %v780
        %v989 = vunpack.c.l.b16 %v781
        %v990 = vunpack.c.h.b16 %v781
        %v991 = vunpack.c.l.b16 %v782
        %v992 = vunpack.c.h.b16 %v782
        %v993 = vunpack.c.l.b16 %v783
        %v994 = vunpack.c.h.b16 %v783
        %v995 = vunpack.c.l.b16 %v784
        %v996 = vunpack.c.h.b16 %v784
        %v997 = vunpack.c.l.b16 %v785
        %v998 = vunpack.c.h.b16 %v785
        %v999 = vunpack.c.l.b16 %v786
        %v1000 = vunpack.c.h.b16 %v786
        %v1001 = vunpack.c.l.b16 %v787
        %v1002 = vunpack.c.h.b16 %v787
        %v1003 = vunpack.c.l.b16 %v788
        %v1004 = vunpack.c.h.b16 %v788
        %v1005 = vunpack.c.l.b16 %v789
        %v1006 = vunpack.c.h.b16 %v789
        %v1007 = vunpack.c.l.b16 %v790
        %v1008 = vunpack.c.h.b16 %v790
        %v1009 = vunpack.c.l.b16 %v791
        %v1010 = vunpack.c.h.b16 %v791
        %v1011 = vunpack.c.l.b16 %v792
        %v1012 = vunpack.c.h.b16 %v792
        %v1013 = vunpack.c.l.b16 %v793
        %v1014 = vunpack.c.h.b16 %v793
        %v1015 = vunpack.c.l.b16 %v794
        %v1016 = vunpack.c.h.b16 %v794
        %v1017 = vunpack.c.l.b16 %v795
        %v1018 = vunpack.c.h.b16 %v795
        %v1019 = vunpack.c.l.b16 %v796
        %v1020 = vunpack.c.h.b16 %v796
        %v1021 = vunpack.c.l.b16 %v797
        %v1022 = vunpack.c.h.b16 %v797
        %v1023 = vunpack.c.l.b16 %v798
        %v1024 = vunpack.c.h.b16 %v798
        %v1025 = vunpack.c.l.b16 %v799
        %v1026 = vunpack.c.h.b16 %v799
        %v1027 = vunpack.c.l.b16 %v800
        %v1028 = vunpack.c.h.b16 %v800
        %v1029 = vunpack.c.l.b16 %v801
        %v1030 = vunpack.c.h.b16 %v801
        %v1031 = vunpack.c.l.b16 %v802
        %v1032 = vunpack.c.h.b16 %v802
        %v1033 = vunpack.c.l.b16 %v803
        %v1034 = vunpack.c.h.b16 %v803
        %v1035 = vunpack.c.l.b16 %v804
        %v1036 = vunpack.c.h.b16 %v804
        %v1037 = vunpack.c.l.b16 %v805
        %v1038 = vunpack.c.h.b16 %v805
        %v1039 = vunpack.c.l.b16 %v806
        %v1040 = vunpack.c.h.b16 %v806
        %v1041 = vunpack.c.l.b16 %v807
        %v1042 = vunpack.c.h.b16 %v807
        %v1043 = vunpack.c.l.b16 %v808
        %v1044 = vunpack.c.h.b16 %v808
        %v1045 = vunpack.c.l.b16 %v809
        %v1046 = vunpack.c.h.b16 %v809
        %v1047 = vunpack.c.l.b16 %v810
        %v1048 = vunpack.c.h.b16 %v810
        %v1049 = vunpack.c.l.b16 %v811
        %v1050 = vunpack.c.h.b16 %v811
        %v1051 = vunpack.c.l.b16 %v812
        %v1052 = vunpack.c.h.b16 %v812
        %v1053 = vunpack.c.l.b16 %v813
        %v1054 = vunpack.c.h.b16 %v813
        %v1055 = vunpack.c.l.b16 %v814
        %v1056 = vunpack.c.h.b16 %v814
        %v1057 = vunpack.c.l.b16 %v815
        %v1058 = vunpack.c.h.b16 %v815
        %v1059 = vunpack.c.l.b16 %v816
        %v1060 = vunpack.c.h.b16 %v816
        %v1061 = vunpack.c.l.b16 %v817
        %v1062 = vunpack.c.h.b16 %v817
        %v1063 = vunpack.c.l.b16 %v818
        %v1064 = vunpack.c.h.b16 %v818
        %v1065 = vunpack.c.l.b16 %v819
        %v1066 = vunpack.c.h.b16 %v819
        %v1067 = vunpack.c.l.b16 %v820
        %v1068 = vunpack.c.h.b16 %v820
        %v1069 = vunpack.c.l.b16 %v821
        %v1070 = vunpack.c.h.b16 %v821
        %v1071 = vunpack.c.l.b16 %v822
        %v1072 = vunpack.c.h.b16 %v822
        %v1073 = vunpack.c.l.b16 %v823
        %v1074 = vunpack.c.h.b16 %v823
        %v1075 = vunpack.c.l.b16 %v824
        %v1076 = vunpack.c.h.b16 %v824
        %v1077 = vunpack.c.l.b16 %v825
        %v1078 = vunpack.c.h.b16 %v825
        %v1079 = vunpack.c.l.b16 %v826
        %v1080 = vunpack.c.h.b16 %v826
        %v1081 = vunpack.c.l.b16 %v827
        %v1082 = vunpack.c.h.b16 %v827
        %v1083 = vunpack.c.l.b16 %v828
        %v1084 = vunpack.c.h.b16 %v828
        %v1085 = vunpack.c.l.b16 %v829
        %v1086 = vunpack.c.h.b16 %v829
        %v1087 = vunpack.c.l.b16 %v830
        %v1088 = vunpack.c.h.b16 %v830
        %v1089 = vunpack.c.l.b16 %v831
        %v1090 = vunpack.c.h.b16 %v831
        %v1091 = vunpack.c.l.b16 %v832
        %v1092 = vunpack.c.h.b16 %v832
        %v1093 = vunpack.c.l.b16 %v833
        %v1094 = vunpack.c.h.b16 %v833
        %v1095 = vunpack.c.l.b16 %v834
        %v1096 = vunpack.c.h.b16 %v834
        %v1097 = vunpack.c.l.b16 %v835
        %v1098 = vunpack.c.h.b16 %v835
        %v1099 = vunpack.c.l.b16 %v836
        %v1100 = vunpack.c.h.b16 %v836
        %v1101 = vunpack.c.l.b16 %v837
        %v1102 = vunpack.c.h.b16 %v837
        %v1103 = vunpack.c.l.b16 %v838
        %v1104 = vunpack.c.h.b16 %v838
        %v1105 = vunpack.c.l.b16 %v839
        %v1106 = vunpack.c.h.b16 %v839
        %v1107 = vunpack.c.l.b16 %v840
        %v1108 = vunpack.c.h.b16 %v840
        %v1109 = vunpack.c.l.b16 %v841
        %v1110 = vunpack.c.h.b16 %v841
        %v1111 = vunpack.c.l.b16 %v842
        %v1112 = vunpack.c.h.b16 %v842
        %v1113 = vunpack.c.l.b16 %v843
        %v1114 = vunpack.c.h.b16 %v843
        %v1115 = vunpack.c.l.b16 %v844
        %v1116 = vunpack.c.h.b16 %v844
        %v1117 = vunpack.c.l.b16 %v845
        %v1118 = vunpack.c.h.b16 %v845
        %v1119 = vunpack.c.l.b16 %v846
        %v1120 = vunpack.c.h.b16 %v846
        %v1121 = vunpack.c.l.b16 %v847
        %v1122 = vunpack.c.h.b16 %v847
        %v1123 = vunpack.c.l.b16 %v848
        %v1124 = vunpack.c.h.b16 %v848
        %v1125 = vunpack.c.l.b16 %v849
        %v1126 = vunpack.c.h.b16 %v849
        %v1127 = vunpack.c.l.b16 %v850
        %v1128 = vunpack.c.h.b16 %v850
        %v1129 = vunpack.c.l.b16 %v851
        %v1130 = vunpack.c.h.b16 %v851
        %v1131 = vunpack.c.l.b16 %v852
        %v1132 = vunpack.c.h.b16 %v852
        %v1133 = vunpack.c.l.b16 %v853
        %v1134 = vunpack.c.h.b16 %v853
        %v1135 = vunpack.c.l.b16 %v854
        %v1136 = vunpack.c.h.b16 %v854
        %v1137 = vunpack.c.l.b16 %v855
        %v1138 = vunpack.c.h.b16 %v855
        %v1139 = vunpack.c.l.b16 %v856
        %v1140 = vunpack.c.h.b16 %v856
        %v1141 = vunpack.c.l.b16 %v857
        %v1142 = vunpack.c.h.b16 %v857
        %v1143 = vunpack.c.l.b16 %v858
        %v1144 = vunpack.c.h.b16 %v858
        %v1145 = vunpack.c.l.b16 %v859
        %v1146 = vunpack.c.h.b16 %v859
        %v1147 = vunpack.c.l.b16 %v860
        %v1148 = vunpack.c.h.b16 %v860
        %v1149 = vpack.c.b16 %v959, %v957
        %v1150 = vpack.c.b16 %v960, %v958
        %v1151 = vpack.c.b16 %v963, %v961
        %v1152 = vpack.c.b16 %v964, %v962
        %v1153 = vpack.c.b16 %v967, %v965
        %v1154 = vpack.c.b16 %v968, %v966
        %v1155 = vpack.c.b16 %v971, %v969
        %v1156 = vpack.c.b16 %v972, %v970
        %v1157 = vpack.c.b16 %v975, %v973
        %v1158 = vpack.c.b16 %v976, %v974
        %v1159 = vpack.c.b16 %v979, %v977
        %v1160 = vpack.c.b16 %v980, %v978
        %v1161 = vpack.c.b16 %v983, %v981
        %v1162 = vpack.c.b16 %v984, %v982
        %v1163 = vpack.c.b16 %v987, %v985
        %v1164 = vpack.c.b16 %v988, %v986
        %v1165 = vpack.c.b16 %v991, %v989
        %v1166 = vpack.c.b16 %v992, %v990
        %v1167 = vpack.c.b16 %v995, %v993
        %v1168 = vpack.c.b16 %v996, %v994
        %v1169 = vpack.c.b16 %v999, %v997
        %v1170 = vpack.c.b16 %v1000, %v998
        %v1171 = vpack.c.b16 %v1003, %v1001
        %v1172 = vpack.c.b16 %v1004, %v1002
        %v1173 = vpack.c.b16 %v1007, %v1005
        %v1174 = vpack.c.b16 %v1008, %v1006
        %v1175 = vpack.c.b16 %v1011, %v1009
        %v1176 = vpack.c.b16 %v1012, %v1010
        %v1177 = vpack.c.b16 %v1015, %v1013
        %v1178 = vpack.c.b16 %v1016, %v1014
        %v1179 = vpack.c.b16 %v1019, %v1017
        %v1180 = vpack.c.b16 %v1020, %v1018
        %v1181 = vpack.c.b16 %v1023, %v1021
        %v1182 = vpack.c.b16 %v1024, %v1022
        %v1183 = vpack.c.b16 %v1027, %v1025
        %v1184 = vpack.c.b16 %v1028, %v1026
        %v1185 = vpack.c.b16 %v1031, %v1029
        %v1186 = vpack.c.b16 %v1032, %v1030
        %v1187 = vpack.c.b16 %v1035, %v1033
        %v1188 = vpack.c.b16 %v1036, %v1034
        %v1189 = vpack.c.b16 %v1039, %v1037
        %v1190 = vpack.c.b16 %v1040, %v1038
        %v1191 = vpack.c.b16 %v1043, %v1041
        %v1192 = vpack.c.b16 %v1044, %v1042
        %v1193 = vpack.c.b16 %v1047, %v1045
        %v1194 = vpack.c.b16 %v1048, %v1046
        %v1195 = vpack.c.b16 %v1051, %v1049
        %v1196 = vpack.c.b16 %v1052, %v1050
        %v1197 = vpack.c.b16 %v1055, %v1053
        %v1198 = vpack.c.b16 %v1056, %v1054
        %v1199 = vpack.c.b16 %v1059, %v1057
        %v1200 = vpack.c.b16 %v1060, %v1058
        %v1201 = vpack.c.b16 %v1063, %v1061
        %v1202 = vpack.c.b16 %v1064, %v1062
        %v1203 = vpack.c.b16 %v1067, %v1065
        %v1204 = vpack.c.b16 %v1068, %v1066
        %v1205 = vpack.c.b16 %v1071, %v1069
        %v1206 = vpack.c.b16 %v1072, %v1070
        %v1207 = vpack.c.b16 %v1075, %v1073
        %v1208 = vpack.c.b16 %v1076, %v1074
        %v1209 = vpack.c.b16 %v1079, %v1077
        %v1210 = vpack.c.b16 %v1080, %v1078
        %v1211 = vpack.c.b16 %v1083, %v1081
        %v1212 = vpack.c.b16 %v1084, %v1082
        %v1213 = vpack.c.b16 %v1087, %v1085
        %v1214 = vpack.c.b16 %v1088, %v1086
        %v1215 = vpack.c.b16 %v1091, %v1089
        %v1216 = vpack.c.b16 %v1092, %v1090
        %v1217 = vpack.c.b16 %v1095, %v1093
        %v1218 = vpack.c.b16 %v1096, %v1094
        %v1219 = vpack.c.b16 %v1099, %v1097
        %v1220 = vpack.c.b16 %v1100, %v1098
        %v1221 = vpack.c.b16 %v1103, %v1101
        %v1222 = vpack.c.b16 %v1104, %v1102
        %v1223 = vpack.c.b16 %v1107, %v1105
        %v1224 = vpack.c.b16 %v1108, %v1106
        %v1225 = vpack.c.b16 %v1111, %v1109
        %v1226 = vpack.c.b16 %v1112, %v1110
        %v1227 = vpack.c.b16 %v1115, %v1113
        %v1228 = vpack.c.b16 %v1116, %v1114
        %v1229 = vpack.c.b16 %v1119, %v1117
        %v1230 = vpack.c.b16 %v1120, %v1118
        %v1231 = vpack.c.b16 %v1123, %v1121
        %v1232 = vpack.c.b16 %v1124, %v1122
        %v1233 = vpack.c.b16 %v1127, %v1125
        %v1234 = vpack.c.b16 %v1128, %v1126
        %v1235 = vpack.c.b16 %v1131, %v1129
        %v1236 = vpack.c.b16 %v1132, %v1130
        %v1237 = vpack.c.b16 %v1135, %v1133
        %v1238 = vpack.c.b16 %v1136, %v1134
        %v1239 = vpack.c.b16 %v1139, %v1137
        %v1240 = vpack.c.b16 %v1140, %v1138
        %v1241 = vpack.c.b16 %v1143, %v1141
        %v1242 = vpack.c.b16 %v1144, %v1142
        %v1243 = vpack.c.b16 %v1147, %v1145
        %v1244 = vpack.c.b16 %v1148, %v1146
        %1341 = vmatpush.bf16.msra.mxu0 %v1163
        %1342 = vmatpush.bf16.msra.mxu0 %v1161
        %1343 = vmatpush.bf16.msra.mxu0 %v1159
        %1344 = vmatpush.bf16.msra.mxu0 %v1157
        %1345 = vmatpush.bf16.msra.mxu0 %v1155
        %1346 = vmatpush.bf16.msra.mxu0 %v1153
        %1347 = vmatpush.bf16.msra.mxu0 %v1151
        %1348 = vmatpush.bf16.msra.mxu0 %v1149
        %1349 = vmatmul.bf16.gmra.mxu0 %v753
        %v1350 = vpop.f32.mrf.mxu0
        %v1351 = vadd.f32 0.0, %v1350
        %v1352 = vpop.f32.mrf.mxu0
        %v1353 = vadd.f32 0.0, %v1352
        %1354 = vdwg.mxu0
        %1355 = vmatpush.bf16.msra.mxu0 %v1179
        %1356 = vmatpush.bf16.msra.mxu0 %v1177
        %1357 = vmatpush.bf16.msra.mxu0 %v1175
        %1358 = vmatpush.bf16.msra.mxu0 %v1173
        %1359 = vmatpush.bf16.msra.mxu0 %v1171
        %1360 = vmatpush.bf16.msra.mxu0 %v1169
        %1361 = vmatpush.bf16.msra.mxu0 %v1167
        %1362 = vmatpush.bf16.msra.mxu0 %v1165
        %1363 = vmatmul.bf16.gmra.mxu0 %v754
        %v1364 = vpop.f32.mrf.mxu0
        %v1365 = vadd.f32 %v1351, %v1364
        %v1366 = vpop.f32.mrf.mxu0
        %v1367 = vadd.f32 %v1353, %v1366
        %1368 = vdwg.mxu0
        %1369 = vmatpush.bf16.msra.mxu0 %v1195
        %1370 = vmatpush.bf16.msra.mxu0 %v1193
        %1371 = vmatpush.bf16.msra.mxu0 %v1191
        %1372 = vmatpush.bf16.msra.mxu0 %v1189
        %1373 = vmatpush.bf16.msra.mxu0 %v1187
        %1374 = vmatpush.bf16.msra.mxu0 %v1185
        %1375 = vmatpush.bf16.msra.mxu0 %v1183
        %1376 = vmatpush.bf16.msra.mxu0 %v1181
        %1377 = vmatmul.bf16.gmra.mxu0 %v735
        %v1378 = vpop.f32.mrf.mxu0
        %v1379 = vadd.f32 %v1365, %v1378
        %v1380 = vpop.f32.mrf.mxu0
        %v1381 = vadd.f32 %v1367, %v1380
        %1382 = vdwg.mxu0
        %1383 = vmatpush.bf16.msra.mxu0 %v1211
        %1384 = vmatpush.bf16.msra.mxu0 %v1209
        %1385 = vmatpush.bf16.msra.mxu0 %v1207
        %1386 = vmatpush.bf16.msra.mxu0 %v1205
        %1387 = vmatpush.bf16.msra.mxu0 %v1203
        %1388 = vmatpush.bf16.msra.mxu0 %v1201
        %1389 = vmatpush.bf16.msra.mxu0 %v1199
        %1390 = vmatpush.bf16.msra.mxu0 %v1197
        %1391 = vmatmul.bf16.gmra.mxu0 %v736
        %v1392 = vpop.f32.mrf.mxu0
        %v1393 = vadd.f32 %v1379, %v1392
        %v1394 = vpop.f32.mrf.mxu0
        %v1395 = vadd.f32 %v1381, %v1394
        %1396 = vdwg.mxu0
        %1397 = vmatpush.bf16.msra.mxu0 %v1227
        %1398 = vmatpush.bf16.msra.mxu0 %v1225
        %1399 = vmatpush.bf16.msra.mxu0 %v1223
        %1400 = vmatpush.bf16.msra.mxu0 %v1221
        %1401 = vmatpush.bf16.msra.mxu0 %v1219
        %1402 = vmatpush.bf16.msra.mxu0 %v1217
        %1403 = vmatpush.bf16.msra.mxu0 %v1215
        %1404 = vmatpush.bf16.msra.mxu0 %v1213
        %1405 = vmatmul.bf16.gmra.mxu0 %v761
        %v1406 = vpop.f32.mrf.mxu0
        %v1407 = vadd.f32 %v1393, %v1406
        %v1408 = vpop.f32.mrf.mxu0
        %v1409 = vadd.f32 %v1395, %v1408
        %1410 = vdwg.mxu0
        %1411 = vmatpush.bf16.msra.mxu0 %v1243
        %1412 = vmatpush.bf16.msra.mxu0 %v1241
        %1413 = vmatpush.bf16.msra.mxu0 %v1239
        %1414 = vmatpush.bf16.msra.mxu0 %v1237
        %1415 = vmatpush.bf16.msra.mxu0 %v1235
        %1416 = vmatpush.bf16.msra.mxu0 %v1233
        %1417 = vmatpush.bf16.msra.mxu0 %v1231
        %1418 = vmatpush.bf16.msra.mxu0 %v1229
        %1419 = vmatmul.bf16.gmra.mxu0 %v762
        %v1420 = vpop.f32.mrf.mxu0
        %v1421 = vadd.f32 %v1407, %v1420
        %v1422 = vpop.f32.mrf.mxu0
        %v1423 = vadd.f32 %v1409, %v1422
        %1424 = vdwg.mxu0
        %1425 = vmatpush.bf16.msra.mxu0 %v1164
        %1426 = vmatpush.bf16.msra.mxu0 %v1162
        %1427 = vmatpush.bf16.msra.mxu0 %v1160
        %1428 = vmatpush.bf16.msra.mxu0 %v1158
        %1429 = vmatpush.bf16.msra.mxu0 %v1156
        %1430 = vmatpush.bf16.msra.mxu0 %v1154
        %1431 = vmatpush.bf16.msra.mxu0 %v1152
        %1432 = vmatpush.bf16.msra.mxu0 %v1150
        %1433 = vmatmul.bf16.gmra.mxu0 %v753
        %v1434 = vpop.f32.mrf.mxu0
        %v1435 = vadd.f32 0.0, %v1434
        %v1436 = vpop.f32.mrf.mxu0
        %v1437 = vadd.f32 0.0, %v1436
        %1438 = vdwg.mxu0
        %1439 = vmatpush.bf16.msra.mxu0 %v1180
        %1440 = vmatpush.bf16.msra.mxu0 %v1178
        %1441 = vmatpush.bf16.msra.mxu0 %v1176
        %1442 = vmatpush.bf16.msra.mxu0 %v1174
        %1443 = vmatpush.bf16.msra.mxu0 %v1172
        %1444 = vmatpush.bf16.msra.mxu0 %v1170
        %1445 = vmatpush.bf16.msra.mxu0 %v1168
        %1446 = vmatpush.bf16.msra.mxu0 %v1166
        %1447 = vmatmul.bf16.gmra.mxu0 %v754
        %v1448 = vpop.f32.mrf.mxu0
        %v1449 = vadd.f32 %v1435, %v1448
        %v1450 = vpop.f32.mrf.mxu0
        %v1451 = vadd.f32 %v1437, %v1450
        %1452 = vdwg.mxu0
        %1453 = vmatpush.bf16.msra.mxu0 %v1196
        %1454 = vmatpush.bf16.msra.mxu0 %v1194
        %1455 = vmatpush.bf16.msra.mxu0 %v1192
        %1456 = vmatpush.bf16.msra.mxu0 %v1190
        %1457 = vmatpush.bf16.msra.mxu0 %v1188
        %1458 = vmatpush.bf16.msra.mxu0 %v1186
        %1459 = vmatpush.bf16.msra.mxu0 %v1184
        %1460 = vmatpush.bf16.msra.mxu0 %v1182
        %1461 = vmatmul.bf16.gmra.mxu0 %v735
        %v1462 = vpop.f32.mrf.mxu0
        %v1463 = vadd.f32 %v1449, %v1462
        %v1464 = vpop.f32.mrf.mxu0
        %v1465 = vadd.f32 %v1451, %v1464
        %1466 = vdwg.mxu0
        %1467 = vmatpush.bf16.msra.mxu0 %v1212
        %1468 = vmatpush.bf16.msra.mxu0 %v1210
        %1469 = vmatpush.bf16.msra.mxu0 %v1208
        %1470 = vmatpush.bf16.msra.mxu0 %v1206
        %1471 = vmatpush.bf16.msra.mxu0 %v1204
        %1472 = vmatpush.bf16.msra.mxu0 %v1202
        %1473 = vmatpush.bf16.msra.mxu0 %v1200
        %1474 = vmatpush.bf16.msra.mxu0 %v1198
        %1475 = vmatmul.bf16.gmra.mxu0 %v736
        %v1476 = vpop.f32.mrf.mxu0
        %v1477 = vadd.f32 %v1463, %v1476
        %v1478 = vpop.f32.mrf.mxu0
        %v1479 = vadd.f32 %v1465, %v1478
        %1480 = vdwg.mxu0
        %1481 = vmatpush.bf16.msra.mxu0 %v1228
        %1482 = vmatpush.bf16.msra.mxu0 %v1226
        %1483 = vmatpush.bf16.msra.mxu0 %v1224
        %1484 = vmatpush.bf16.msra.mxu0 %v1222
        %1485 = vmatpush.bf16.msra.mxu0 %v1220
        %1486 = vmatpush.bf16.msra.mxu0 %v1218
        %1487 = vmatpush.bf16.msra.mxu0 %v1216
        %1488 = vmatpush.bf16.msra.mxu0 %v1214
        %1489 = vmatmul.bf16.gmra.mxu0 %v761
        %v1490 = vpop.f32.mrf.mxu0
        %v1491 = vadd.f32 %v1477, %v1490
        %v1492 = vpop.f32.mrf.mxu0
        %v1493 = vadd.f32 %v1479, %v1492
        %1494 = vdwg.mxu0
        %1495 = vmatpush.bf16.msra.mxu0 %v1244
        %1496 = vmatpush.bf16.msra.mxu0 %v1242
        %1497 = vmatpush.bf16.msra.mxu0 %v1240
        %1498 = vmatpush.bf16.msra.mxu0 %v1238
        %1499 = vmatpush.bf16.msra.mxu0 %v1236
        %1500 = vmatpush.bf16.msra.mxu0 %v1234
        %1501 = vmatpush.bf16.msra.mxu0 %v1232
        %1502 = vmatpush.bf16.msra.mxu0 %v1230
        %1503 = vmatmul.bf16.gmra.mxu0 %v762
        %v1504 = vpop.f32.mrf.mxu0
        %v1505 = vadd.f32 %v1491, %v1504
        %v1506 = vpop.f32.mrf.mxu0
        %v1507 = vadd.f32 %v1493, %v1506
        %1508 = vdwg.mxu0
        %v1509 = vperm.slane %v312, 2
        %v1510 = vperm.slane %v313, 2
        %v1511 = vmul.f32 %v1421, %v1509
        %v1512 = vmul.f32 %v1505, %v1510
        %v1513 = vmul.f32 %v1423, %v1509
        %v1514 = vmul.f32 %v1507, %v1510
        %v1515 = vperm.slane %v312, 3
        %v1516 = vperm.slane %v313, 3
        %v1517 = vadd.f32 %v1511, %v1515
        %v1518 = vadd.f32 %v1512, %v1516
        %v1519 = vadd.f32 %v1513, %v1515
        %v1520 = vadd.f32 %v1514, %v1516
        %v1521 = vld [vmem:[#allocation8] sm:$0xff]
        %v1522 = vld [vmem:[#allocation8 + $0x8] sm:$0xff]
        %v1523 = vld [vmem:[#allocation8 + $0x10] sm:$0xff]
        %v1524 = vld [vmem:[#allocation8 + $0x18] sm:$0xff]
        %v1525 = vld [vmem:[#allocation8 + $0x20] sm:$0xff]
        %v1526 = vld [vmem:[#allocation8 + $0x28] sm:$0xff]
        %v1527 = vld [vmem:[#allocation8 + $0x30] sm:$0xff]
        %v1528 = vld [vmem:[#allocation8 + $0x38] sm:$0xff]
        %v1529 = vld [vmem:[#allocation8 + $0x40] sm:$0xff]
        %v1530 = vld [vmem:[#allocation8 + $0x48] sm:$0xff]
        %v1531 = vld [vmem:[#allocation8 + $0x50] sm:$0xff]
        %v1532 = vld [vmem:[#allocation8 + $0x58] sm:$0xff]
        %v1533 = vld [vmem:[#allocation8 + $0x60] sm:$0xff]
        %v1534 = vld [vmem:[#allocation8 + $0x68] sm:$0xff]
        %v1535 = vld [vmem:[#allocation8 + $0x70] sm:$0xff]
        %v1536 = vld [vmem:[#allocation8 + $0x78] sm:$0xff]
        %v1553 = vunpack.c.l.b16 %v1521
        %v1554 = vunpack.c.h.b16 %v1521
        %v1555 = vunpack.c.l.b16 %v1522
        %v1556 = vunpack.c.h.b16 %v1522
        %v1557 = vunpack.c.l.b16 %v1523
        %v1558 = vunpack.c.h.b16 %v1523
        %v1559 = vunpack.c.l.b16 %v1524
        %v1560 = vunpack.c.h.b16 %v1524
        %v1561 = vunpack.c.l.b16 %v1525
        %v1562 = vunpack.c.h.b16 %v1525
        %v1563 = vunpack.c.l.b16 %v1526
        %v1564 = vunpack.c.h.b16 %v1526
        %v1565 = vunpack.c.l.b16 %v1527
        %v1566 = vunpack.c.h.b16 %v1527
        %v1567 = vunpack.c.l.b16 %v1528
        %v1568 = vunpack.c.h.b16 %v1528
        %v1569 = vunpack.c.l.b16 %v1529
        %v1570 = vunpack.c.h.b16 %v1529
        %v1571 = vunpack.c.l.b16 %v1530
        %v1572 = vunpack.c.h.b16 %v1530
        %v1573 = vunpack.c.l.b16 %v1531
        %v1574 = vunpack.c.h.b16 %v1531
        %v1575 = vunpack.c.l.b16 %v1532
        %v1576 = vunpack.c.h.b16 %v1532
        %v1577 = vunpack.c.l.b16 %v1533
        %v1578 = vunpack.c.h.b16 %v1533
        %v1579 = vunpack.c.l.b16 %v1534
        %v1580 = vunpack.c.h.b16 %v1534
        %v1581 = vunpack.c.l.b16 %v1535
        %v1582 = vunpack.c.h.b16 %v1535
        %v1583 = vunpack.c.l.b16 %v1536
        %v1584 = vunpack.c.h.b16 %v1536
        %v1585 = vpack.c.b16 %v1555, %v1553
        %v1586 = vpack.c.b16 %v1556, %v1554
        %v1587 = vpack.c.b16 %v1559, %v1557
        %v1588 = vpack.c.b16 %v1560, %v1558
        %v1589 = vpack.c.b16 %v1563, %v1561
        %v1590 = vpack.c.b16 %v1564, %v1562
        %v1591 = vpack.c.b16 %v1567, %v1565
        %v1592 = vpack.c.b16 %v1568, %v1566
        %v1593 = vpack.c.b16 %v1571, %v1569
        %v1594 = vpack.c.b16 %v1572, %v1570
        %v1595 = vpack.c.b16 %v1575, %v1573
        %v1596 = vpack.c.b16 %v1576, %v1574
        %v1597 = vpack.c.b16 %v1579, %v1577
        %v1598 = vpack.c.b16 %v1580, %v1578
        %v1599 = vpack.c.b16 %v1583, %v1581
        %v1600 = vpack.c.b16 %v1584, %v1582
        %1617 = vmatpush.bf16.msra.mxu0 %v1599
        %1618 = vmatpush.bf16.msra.mxu0 %v1597
        %1619 = vmatpush.bf16.msra.mxu0 %v1595
        %1620 = vmatpush.bf16.msra.mxu0 %v1593
        %1621 = vmatpush.bf16.msra.mxu0 %v1591
        %1622 = vmatpush.bf16.msra.mxu0 %v1589
        %1623 = vmatpush.bf16.msra.mxu0 %v1587
        %1624 = vmatpush.bf16.msra.mxu0 %v1585
        %1625 = vmatmul.bf16.gmra.mxu0 %v318
        %v1626 = vpop.f32.mrf.mxu0
        %v1627 = vadd.f32 0.0, %v1626
        %v1628 = vpop.f32.mrf.mxu0
        %v1629 = vadd.f32 0.0, %v1628
        %1630 = vdwg.mxu0
        %1631 = vmatpush.bf16.msra.mxu0 %v1600
        %1632 = vmatpush.bf16.msra.mxu0 %v1598
        %1633 = vmatpush.bf16.msra.mxu0 %v1596
        %1634 = vmatpush.bf16.msra.mxu0 %v1594
        %1635 = vmatpush.bf16.msra.mxu0 %v1592
        %1636 = vmatpush.bf16.msra.mxu0 %v1590
        %1637 = vmatpush.bf16.msra.mxu0 %v1588
        %1638 = vmatpush.bf16.msra.mxu0 %v1586
        %1639 = vmatmul.bf16.gmra.mxu0 %v318
        %v1640 = vpop.f32.mrf.mxu0
        %v1641 = vadd.f32 0.0, %v1640
        %v1642 = vpop.f32.mrf.mxu0
        %v1643 = vadd.f32 0.0, %v1642
        %1644 = vdwg.mxu0
        %v1645 = vperm.slane %v312, 4
        %v1646 = vperm.slane %v313, 4
        %v1647 = vmul.f32 %v1627, %v1645
        %v1648 = vmul.f32 %v1641, %v1646
        %v1649 = vmul.f32 %v1629, %v1645
        %v1650 = vmul.f32 %v1643, %v1646
        %v1651 = vperm.slane %v312, 5
        %v1652 = vperm.slane %v313, 5
        %v1653 = vadd.f32 %v1647, %v1651
        %v1654 = vadd.f32 %v1648, %v1652
        %v1655 = vadd.f32 %v1649, %v1651
        %v1656 = vadd.f32 %v1650, %v1652
        %v1657 = vadd.f32 %v1517, %v1653
        %v1658 = vadd.f32 %v1518, %v1654
        %v1659 = vadd.f32 %v1519, %v1655
        %v1660 = vadd.f32 %v1520, %v1656
        %v1661 = vmax.f32 %v1657, 0.0
        %v1662 = vmax.f32 %v1658, 0.0
        %v1663 = vmax.f32 %v1659, 0.0
        %v1664 = vmax.f32 %v1660, 0.0
        %1665 = vst [vmem:[%s308] sm:$0xff] %v1661
        %1666 = vst [vmem:[%s308 + $0x8] sm:$0xff] %v1662
        %1667 = vst [vmem:[%s308 + $0x10] sm:$0xff] %v1663
        %1668 = vst [vmem:[%s308 + $0x18] sm:$0xff] %v1664
        %s1669 = sand.u32 %s142, 1
        %s1670 = scalar_lea.sflag [#allocation4], %s1669
        %s1671 = sand.u32 %s142, 1
        %s1672 = smul.addr %s1671, 32
        %s1673 = scalar_lea.vmem [#allocation11], %s1672
        // Predicated region
        $region61: #{tpu_custom_call.1} parent=39 // pred_check
          %p1674 = pneg %p152
        $region62: #{tpu_custom_call.1} parent=39 // pred_check_branch
          %1676 = sbr.rel (%p1674) target = $region64
        $region63: #{tpu_custom_call.1} parent=39 // pred_region
          %1678 = vsyncadd %s1670, 0
          %s1679 = smul.addr %s24, 4
          %s1680 = smul.addr %s1679, 8
          %s1681 = scalar_lea.hbm %s5, %s1680
          %s1682 = sshll.u32 %s1673, 4
          %s1683 = int_to_ptr.vmem [resolvable:$true] %s1682
          %s1684 = sshll.u32 %s1681, 4
          %s1685 = int_to_ptr.hbm [resolvable:$true] %s1684
          %1690 = dma.vmem_to_hbm [thread:$0]  %s1683, 512, %s1685, %s1670, 256, 256, 16
        $region64: #{tpu_custom_call.1} parent=39 // pred_fallthru
          _
      $region40: #{tpu_custom_call.1} parent=5 // pred_fallthru
        _
      %p1691 = scmp.le.s32.totalorder 2, %s19
      // Predicated region
      $region65: #{tpu_custom_call.1} parent=5 // pred_check
        %p1692 = pneg %p1691
      $region66: #{tpu_custom_call.1} parent=5 // pred_check_branch
        %1694 = sbr.rel (%p1692) target = $region68
      $region67: #{tpu_custom_call.1} parent=5 // pred_region
        %s1695 = ssub.s32 %s19, 2
        // Predicated region
        $region69: #{tpu_custom_call.1} parent=67 // pred_check
          %p1696 = pneg %p158
        $region70: #{tpu_custom_call.1} parent=67 // pred_check_branch
          %1698 = sbr.rel (%p1696) target = $region72
        $region71: #{tpu_custom_call.1} parent=67 // pred_region
          %s1699 = sand.u32 %s143, 1
          %s1700 = scalar_lea.sflag [#allocation4], %s1699
          %s1701 = sand.u32 %s143, 1
          %s1702 = smul.addr %s1701, 32
          %s1703 = scalar_lea.vmem [#allocation11], %s1702
          %1705 = dma.done %s1700, 512
        $region72: #{tpu_custom_call.1} parent=67 // pred_fallthru
          _
      $region68: #{tpu_custom_call.1} parent=5 // pred_fallthru
        _
    $region6: #{tpu_custom_call.1} parent=1 // loop_footer
      %s23 = sadd.s32 1, %s19
    $region7: #{tpu_custom_call.1} parent=1 // loop_footer_branch
      %18 = sbr.rel target = $region3
    $region8: #{tpu_custom_call.1} parent=1 // loop_exit
      _
    %1706 = vsyncpa [#allocation3], 1
    %s1707 = scalar_lea.sflag [#allocation3], 1
    %1708 = vsyncpa %s1707, 1
    %1709 = vsyncpa [#allocation6], 1
    %1710 = vsyncpa [#allocation9], 1
    %1711 = vsyncpa [#allocation4], 1
    %s1712 = scalar_lea.sflag [#allocation4], 1
    %1713 = vsyncpa %s1712, 1

</llo_original>
